<compile_context>
chip_gen: v7x
topology: tpu7x:2x2x1
jax: 0.10.0
libtpu: 0.0.40
codegen_flags: <defaults>
</compile_context>

<pallas_src>
import jax
import jax.numpy as jnp
from jax.experimental import pallas as pl
from jax.experimental.pallas import tpu as pltpu

K = 7            # conv kernel size
PAD = K // 2     # padding = 3


# --------------------------------------------------------------------------
# Kernel
# --------------------------------------------------------------------------
def _spatial_attention_kernel(x_ref, band_ref, o_ref, sum_scr, max_scr, rpad_scr):
    """One (batch tile, channel tile) grid step.

    x_ref    : VMEM (TB, TC, H, W)        -- input chunk (natural NCHW layout)
    band_ref : VMEM (2*K, TB*W, TB*W) f32 -- banded / block-diag conv weights
    o_ref    : VMEM (1, H, TB*W)          -- lane-packed output tile
    sum_scr  : VMEM (H, TB*W) f32         -- running channel sum  (lane-packed)
    max_scr  : VMEM (H, TB*W) f32         -- running channel max  (lane-packed)
    rpad_scr : VMEM (2, H+2*PAD, TB*W) f32-- row-padded conv working maps
    """
    ci = pl.program_id(1)
    n_ci = pl.num_programs(1)

    TB, _, H, W = x_ref.shape
    TBW = TB * W

    # ---- streamed channel reduction: one pass per chunk for sum AND max ----
    xb = x_ref[...].astype(jnp.float32)            # upcast per chunk only
    part_sum = jnp.sum(xb, axis=1)                 # (TB, H, W)
    part_max = jnp.max(xb, axis=1)                 # (TB, H, W)

    @pl.when(ci == 0)
    def _init():
        sum_scr[...] = jnp.zeros((H, TBW), jnp.float32)
        max_scr[...] = jnp.full((H, TBW), -jnp.inf, jnp.float32)

    # Lane-pack the TB batch elements side by side along the lane axis.
    for b in range(TB):
        lane = pl.ds(b * W, W)
        sum_scr[:, lane] += part_sum[b]
        max_scr[:, lane] = jnp.maximum(max_scr[:, lane], part_max[b])

    # ---- final channel step: 7x7 conv as banded MXU matmuls, then sigmoid ----
    @pl.when(ci == n_ci - 1)
    def _finalize():
        # Zero only the PAD-row borders; the interior is fully overwritten
        # below.  (W-direction padding lives inside the band matrices and the
        # mean's 1/C is folded into the channel-0 bands.)
        zrows = jnp.zeros((PAD, TBW), jnp.float32)
        for c in range(2):
            rpad_scr[c, pl.ds(0, PAD), :] = zrows
            rpad_scr[c, pl.ds(PAD + H, PAD), :] = zrows
        rpad_scr[0, pl.ds(PAD, H), :] = sum_scr[...]
        rpad_scr[1, pl.ds(PAD, H), :] = max_scr[...]

        # 2*K = 14 small, statically-unrolled MXU matmuls; only sublane-offset
        # slices remain (no lane-unaligned reads).
        acc = jnp.zeros((H, TBW), jnp.float32)
        for c in range(2):
            for ki in range(K):
                acc = acc + jnp.dot(rpad_scr[c, pl.ds(ki, H), :],
                                    band_ref[c * K + ki],
                                    preferred_element_type=jnp.float32)

        o_ref[0] = jax.nn.sigmoid(acc).astype(o_ref.dtype)


# --------------------------------------------------------------------------
# Wrapper-side helpers
# --------------------------------------------------------------------------
def _build_bands(weight, C, W, TB):
    """Banded (and batch-block-diagonal) conv weight matrices.

    Returns f32 (2*K, TB*W, TB*W).  band[c*K + ki][u, v] = w[c, ki, u - v + PAD]
    inside the 7-tap band and on the batch block diagonal, else 0.  The mean's
    1/C is folded into channel 0; the implicit zero padding along W is realized
    simply by dropping out-of-range taps.
    """
    w = weight.reshape(2, K, K).astype(jnp.float32)
    w = w * jnp.array([1.0 / C, 1.0], jnp.float32)[:, None, None]
    u = jnp.arange(W)[:, None]
    v = jnp.arange(W)[None, :]
    d = u - v + PAD
    valid = (d >= 0) & (d < K)
    taps = w[:, :, jnp.clip(d, 0, K - 1)]               # (2, K, W, W)
    bands = jnp.where(valid[None, None], taps, 0.0)     # (2, K, W, W)
    if TB > 1:
        eye = jnp.eye(TB, dtype=jnp.float32)
        bands = jnp.einsum('bB,ckuv->ckbuBv', eye, bands)
        bands = bands.reshape(2, K, TB * W, TB * W)
    return bands.reshape(2 * K, TB * W, TB * W)


def _largest_divisor_leq(n, cap):
    cap = max(1, min(n, cap))
    for t in range(cap, 0, -1):
        if n % t == 0:
            return t
    return 1


def _pick_batch_tile(N, W):
    """How many batch elements to pack along the lane axis per grid step."""
    lane_cap = max(1, 128 // W) if W < 128 else 1
    divs = [d for d in range(1, min(N, lane_cap) + 1) if N % d == 0]
    best = max(divs)
    # Leave >= 2 batch-grid steps for v7x's two TensorCores when that costs at
    # most 2x in lane packing.
    two_step = [d for d in divs if N // d >= 2]
    if two_step and 2 * max(two_step) >= best:
        return max(two_step)
    return best


def spatial_attention(x, weight, *, max_block_bytes=2 * 1024 * 1024):
    """x: (N, C, H, W); weight: (1, 2, K, K)  ->  (N, 1, H, W)."""
    N, C, H, W = x.shape
    TB = _pick_batch_tile(N, W)
    TBW = TB * W
    nb = N // TB

    # Channel tile from a ~2 MiB per-block budget (double-buffered blocks stay
    # in the few-MiB sweet spot on v5e/v6e/v7x).
    itemsize = jnp.dtype(x.dtype).itemsize
    tc_cap = max(1, max_block_bytes // max(1, TB * H * W * itemsize))
    TC = _largest_divisor_leq(C, tc_cap)
    nc = C // TC

    bands = _build_bands(weight, C, W, TB)               # (2K, TBW, TBW) f32

    out_packed = pl.pallas_call(
        _spatial_attention_kernel,
        out_shape=jax.ShapeDtypeStruct((nb, H, TBW), x.dtype),
        grid_spec=pltpu.PrefetchScalarGridSpec(
            num_scalar_prefetch=0,
            grid=(nb, nc),
            in_specs=[
                pl.BlockSpec((TB, TC, H, W), lambda bi, ci: (bi, ci, 0, 0)),
                pl.BlockSpec((2 * K, TBW, TBW), lambda bi, ci: (0, 0, 0)),
            ],
            out_specs=pl.BlockSpec((1, H, TBW), lambda bi, ci: (bi, 0, 0)),
            scratch_shapes=[
                pltpu.VMEM((H, TBW), jnp.float32),               # running sum
                pltpu.VMEM((H, TBW), jnp.float32),               # running max
                pltpu.VMEM((2, H + 2 * PAD, TBW), jnp.float32),  # row-padded maps
            ],
        ),
        compiler_params=pltpu.CompilerParams(
            dimension_semantics=("parallel", "arbitrary"),
            vmem_limit_bytes=32 * 1024 * 1024,
        ),
    )(x, bands)

    # Un-pack the lane-packed batch layout (cheap: only N*H*W output elements).
    y = out_packed.reshape(nb, H, TB, W).transpose(0, 2, 1, 3)
    return y.reshape(N, 1, H, W)


# --------------------------------------------------------------------------
# Reference + test
# --------------------------------------------------------------------------
def _reference(x, weight):
    avg = jnp.mean(x, axis=1, keepdims=True)
    mx = jnp.max(x, axis=1, keepdims=True)
    xc = jnp.concatenate([avg, mx], axis=1)
    y = jax.lax.conv_general_dilated(
        xc, weight, window_strides=(1, 1),
        padding=((PAD, PAD), (PAD, PAD)),
        dimension_numbers=("NCHW", "OIHW", "NCHW"))
    return jax.nn.sigmoid(y)


if __name__ == "__main__":
    key = jax.random.PRNGKey(0)
    kx, kw, kx2 = jax.random.split(key, 3)

    # Small shapes implied by the module: NCHW input, conv weight (1, 2, 7, 7).
    N, C, H, W = 2, 4, 16, 16
    x = jax.random.normal(kx, (N, C, H, W), dtype=jnp.float32)
    fan_in = 2 * K * K
    weight = jax.random.normal(kw, (1, 2, K, K), dtype=jnp.float32) / jnp.sqrt(fan_in)

    ref = _reference(x, weight)

    out = jax.block_until_ready(spatial_attention(x, weight))
    assert out.shape == (N, 1, H, W)
    assert jnp.allclose(out, ref, atol=1e-4, rtol=1e-4), "mismatch (default tiling)"

    # Exercise the multi-step channel reduction (nc > 1) with a tiny block budget.
    out2 = jax.block_until_ready(spatial_attention(x, weight, max_block_bytes=2048))
    assert jnp.allclose(out2, ref, atol=1e-4, rtol=1e-4), "mismatch (channel-tiled)"

    # Exercise lane-packed batch (TB > 1, block-diagonal bands) + channel tiling.
    N2, C2 = 4, 8
    x2 = jax.random.normal(kx2, (N2, C2, H, W), dtype=jnp.float32)
    out3 = jax.block_until_ready(spatial_attention(x2, weight, max_block_bytes=8192))
    ref3 = _reference(x2, weight)
    assert out3.shape == (N2, 1, H, W)
    assert jnp.allclose(out3, ref3, atol=1e-4, rtol=1e-4), "mismatch (lane-packed batch)"

    print("KERNEL_OK")
</pallas_src>

<mosaic_0001>
module attributes {stable_mosaic.version = 11 : i64} {
  func.func @_spatial_attention_kernel(%arg0: i32, %arg1: i32, %arg2: memref<1x4x16x16xf32, #tpu.memory_space<vmem>>, %arg3: memref<14x16x16xf32, #tpu.memory_space<vmem>>, %arg4: memref<1x16x16xf32, #tpu.memory_space<vmem>>, %arg5: memref<16x16xf32, #tpu.memory_space<vmem>>, %arg6: memref<16x16xf32, #tpu.memory_space<vmem>>, %arg7: memref<2x22x16xf32, #tpu.memory_space<vmem>>) attributes {dimension_semantics = [#tpu.dimension_semantics<parallel>, #tpu.dimension_semantics<arbitrary>], iteration_bounds = array<i64: 2, 1>, scalar_prefetch = 0 : i64, scratch_operands = 3 : i64, tpu.core_type = #tpu.core_type<tc>, window_params = [{transform_indices = @transform_0, window_bounds = array<i64: 1, 4, 16, 16>}, {pipeline_mode = #tpu.pipeline_mode<synchronous>, transform_indices = @transform_1, window_bounds = array<i64: 14, 16, 16>}, {transform_indices = @transform_2, window_bounds = array<i64: 1, 16, 16>}]} {
    %c0 = arith.constant 0 : index
    %c0_0 = arith.constant 0 : index
    %c0_1 = arith.constant 0 : index
    %c0_2 = arith.constant 0 : index
    %0 = vector.load %arg2[%c0, %c0_0, %c0_1, %c0_2] : memref<1x4x16x16xf32, #tpu.memory_space<vmem>>, vector<1x4x16x16xf32>
    %cst = arith.constant dense<0.000000e+00> : vector<1x16x16xf32>
    %1 = vector.multi_reduction <add>, %0, %cst [1] : vector<1x4x16x16xf32> to vector<1x16x16xf32>
    %cst_3 = arith.constant dense<0xFF800000> : vector<1x16x16xf32>
    %2 = vector.multi_reduction <maximumf>, %0, %cst_3 [1] : vector<1x4x16x16xf32> to vector<1x16x16xf32>
    %c0_i32 = arith.constant 0 : i32
    %3 = arith.cmpi eq, %arg1, %c0_i32 : i32
    %4 = arith.extui %3 : i1 to i32
    %c0_i32_4 = arith.constant 0 : i32
    %5 = arith.cmpi ne, %4, %c0_i32_4 : i32
    scf.if %5 {
      %cst_15 = arith.constant 0.000000e+00 : f32
      %17 = vector.broadcast %cst_15 : f32 to vector<16x16xf32>
      %c0_16 = arith.constant 0 : index
      %c0_17 = arith.constant 0 : index
      %18 = vector.load %arg5[%c0_16, %c0_17] : memref<16x16xf32, #tpu.memory_space<vmem>>, vector<16x16xf32>
      tpu.vector_store %arg5[%c0_16, %c0_17], %17 {strides = array<i32>} : memref<16x16xf32, #tpu.memory_space<vmem>>, vector<16x16xf32>,
      %cst_18 = arith.constant 0xFF800000 : f32
      %19 = vector.broadcast %cst_18 : f32 to vector<16x16xf32>
      %c0_19 = arith.constant 0 : index
      %c0_20 = arith.constant 0 : index
      %20 = vector.load %arg6[%c0_19, %c0_20] : memref<16x16xf32, #tpu.memory_space<vmem>>, vector<16x16xf32>
      tpu.vector_store %arg6[%c0_19, %c0_20], %19 {strides = array<i32>} : memref<16x16xf32, #tpu.memory_space<vmem>>, vector<16x16xf32>,
    } else {
    }
    %c0_5 = arith.constant 0 : index
    %c0_6 = arith.constant 0 : index
    %6 = vector.load %arg5[%c0_5, %c0_6] : memref<16x16xf32, #tpu.memory_space<vmem>>, vector<16x16xf32>
    %7 = vector.shape_cast %1 : vector<1x16x16xf32> to vector<16x16xf32>
    %8 = arith.addf %6, %7 : vector<16x16xf32>
    %c0_7 = arith.constant 0 : index
    %c0_8 = arith.constant 0 : index
    %9 = vector.load %arg5[%c0_7, %c0_8] : memref<16x16xf32, #tpu.memory_space<vmem>>, vector<16x16xf32>
    tpu.vector_store %arg5[%c0_7, %c0_8], %8 {strides = array<i32>} : memref<16x16xf32, #tpu.memory_space<vmem>>, vector<16x16xf32>,
    %c0_9 = arith.constant 0 : index
    %c0_10 = arith.constant 0 : index
    %10 = vector.load %arg6[%c0_9, %c0_10] : memref<16x16xf32, #tpu.memory_space<vmem>>, vector<16x16xf32>
    %11 = vector.shape_cast %2 : vector<1x16x16xf32> to vector<16x16xf32>
    %12 = arith.maximumf %10, %11 : vector<16x16xf32>
    %c0_11 = arith.constant 0 : index
    %c0_12 = arith.constant 0 : index
    %13 = vector.load %arg6[%c0_11, %c0_12] : memref<16x16xf32, #tpu.memory_space<vmem>>, vector<16x16xf32>
    tpu.vector_store %arg6[%c0_11, %c0_12], %12 {strides = array<i32>} : memref<16x16xf32, #tpu.memory_space<vmem>>, vector<16x16xf32>,
    %c0_i32_13 = arith.constant 0 : i32
    %14 = arith.cmpi eq, %arg1, %c0_i32_13 : i32
    %15 = arith.extui %14 : i1 to i32
    %c0_i32_14 = arith.constant 0 : i32
    %16 = arith.cmpi ne, %15, %c0_i32_14 : i32
    scf.if %16 {
      %cst_15 = arith.constant 0.000000e+00 : f32
      %17 = vector.broadcast %cst_15 : f32 to vector<3x16xf32>
      %c0_16 = arith.constant 0 : index
      %c0_17 = arith.constant 0 : index
      %c0_18 = arith.constant 0 : index
      %18 = vector.load %arg7[%c0_16, %c0_17, %c0_18] : memref<2x22x16xf32, #tpu.memory_space<vmem>>, vector<1x3x16xf32>
      %19 = vector.shape_cast %18 : vector<1x3x16xf32> to vector<3x16xf32>
      %20 = vector.shape_cast %17 : vector<3x16xf32> to vector<1x3x16xf32>
      tpu.vector_store %arg7[%c0_16, %c0_17, %c0_18], %20 {strides = array<i32>} : memref<2x22x16xf32, #tpu.memory_space<vmem>>, vector<1x3x16xf32>,
      %c0_19 = arith.constant 0 : index
      %c19 = arith.constant 19 : index
      %c0_20 = arith.constant 0 : index
      %21 = vector.load %arg7[%c0_19, %c19, %c0_20] : memref<2x22x16xf32, #tpu.memory_space<vmem>>, vector<1x3x16xf32>
      %22 = vector.shape_cast %21 : vector<1x3x16xf32> to vector<3x16xf32>
      %23 = vector.shape_cast %17 : vector<3x16xf32> to vector<1x3x16xf32>
      tpu.vector_store %arg7[%c0_19, %c19, %c0_20], %23 {strides = array<i32>} : memref<2x22x16xf32, #tpu.memory_space<vmem>>, vector<1x3x16xf32>,
      %c1 = arith.constant 1 : index
      %c0_21 = arith.constant 0 : index
      %c0_22 = arith.constant 0 : index
      %24 = vector.load %arg7[%c1, %c0_21, %c0_22] : memref<2x22x16xf32, #tpu.memory_space<vmem>>, vector<1x3x16xf32>
      %25 = vector.shape_cast %24 : vector<1x3x16xf32> to vector<3x16xf32>
      %26 = vector.shape_cast %17 : vector<3x16xf32> to vector<1x3x16xf32>
      tpu.vector_store %arg7[%c1, %c0_21, %c0_22], %26 {strides = array<i32>} : memref<2x22x16xf32, #tpu.memory_space<vmem>>, vector<1x3x16xf32>,
      %c1_23 = arith.constant 1 : index
      %c19_24 = arith.constant 19 : index
      %c0_25 = arith.constant 0 : index
      %27 = vector.load %arg7[%c1_23, %c19_24, %c0_25] : memref<2x22x16xf32, #tpu.memory_space<vmem>>, vector<1x3x16xf32>
      %28 = vector.shape_cast %27 : vector<1x3x16xf32> to vector<3x16xf32>
      %29 = vector.shape_cast %17 : vector<3x16xf32> to vector<1x3x16xf32>
      tpu.vector_store %arg7[%c1_23, %c19_24, %c0_25], %29 {strides = array<i32>} : memref<2x22x16xf32, #tpu.memory_space<vmem>>, vector<1x3x16xf32>,
      %c0_26 = arith.constant 0 : index
      %c0_27 = arith.constant 0 : index
      %30 = vector.load %arg5[%c0_26, %c0_27] : memref<16x16xf32, #tpu.memory_space<vmem>>, vector<16x16xf32>
      %c0_28 = arith.constant 0 : index
      %c3 = arith.constant 3 : index
      %c0_29 = arith.constant 0 : index
      %31 = vector.load %arg7[%c0_28, %c3, %c0_29] : memref<2x22x16xf32, #tpu.memory_space<vmem>>, vector<1x16x16xf32>
      %32 = vector.shape_cast %31 : vector<1x16x16xf32> to vector<16x16xf32>
      %33 = vector.shape_cast %30 : vector<16x16xf32> to vector<1x16x16xf32>
      tpu.vector_store %arg7[%c0_28, %c3, %c0_29], %33 {strides = array<i32>} : memref<2x22x16xf32, #tpu.memory_space<vmem>>, vector<1x16x16xf32>,
      %c0_30 = arith.constant 0 : index
      %c0_31 = arith.constant 0 : index
      %34 = vector.load %arg6[%c0_30, %c0_31] : memref<16x16xf32, #tpu.memory_space<vmem>>, vector<16x16xf32>
      %c1_32 = arith.constant 1 : index
      %c3_33 = arith.constant 3 : index
      %c0_34 = arith.constant 0 : index
      %35 = vector.load %arg7[%c1_32, %c3_33, %c0_34] : memref<2x22x16xf32, #tpu.memory_space<vmem>>, vector<1x16x16xf32>
      %36 = vector.shape_cast %35 : vector<1x16x16xf32> to vector<16x16xf32>
      %37 = vector.shape_cast %34 : vector<16x16xf32> to vector<1x16x16xf32>
      tpu.vector_store %arg7[%c1_32, %c3_33, %c0_34], %37 {strides = array<i32>} : memref<2x22x16xf32, #tpu.memory_space<vmem>>, vector<1x16x16xf32>,
      %cst_35 = arith.constant 0.000000e+00 : f32
      %38 = vector.broadcast %cst_35 : f32 to vector<16x16xf32>
      %c0_36 = arith.constant 0 : index
      %c0_37 = arith.constant 0 : index
      %c0_38 = arith.constant 0 : index
      %39 = vector.load %arg7[%c0_36, %c0_37, %c0_38] : memref<2x22x16xf32, #tpu.memory_space<vmem>>, vector<1x16x16xf32>
      %40 = vector.shape_cast %39 : vector<1x16x16xf32> to vector<16x16xf32>
      %c0_39 = arith.constant 0 : index
      %c0_40 = arith.constant 0 : index
      %c0_41 = arith.constant 0 : index
      %41 = vector.load %arg3[%c0_39, %c0_40, %c0_41] : memref<14x16x16xf32, #tpu.memory_space<vmem>>, vector<1x16x16xf32>
      %42 = vector.shape_cast %41 : vector<1x16x16xf32> to vector<16x16xf32>
      %cst_42 = arith.constant dense<0.000000e+00> : vector<16x16xf32>
      %43 = tpu.matmul %40, %42, %cst_42 {dimension_numbers = #tpu.dot_dimension_numbers<[1], [0], [0], [1], [0, 0, 1, 1], [], []>} : vector<16x16xf32>, vector<16x16xf32>, vector<16x16xf32> -> vector<16x16xf32>
      %44 = arith.addf %38, %43 : vector<16x16xf32>
      %c0_43 = arith.constant 0 : index
      %c1_44 = arith.constant 1 : index
      %c0_45 = arith.constant 0 : index
      %45 = vector.load %arg7[%c0_43, %c1_44, %c0_45] : memref<2x22x16xf32, #tpu.memory_space<vmem>>, vector<1x16x16xf32>
      %46 = vector.shape_cast %45 : vector<1x16x16xf32> to vector<16x16xf32>
      %c1_46 = arith.constant 1 : index
      %c0_47 = arith.constant 0 : index
      %c0_48 = arith.constant 0 : index
      %47 = vector.load %arg3[%c1_46, %c0_47, %c0_48] : memref<14x16x16xf32, #tpu.memory_space<vmem>>, vector<1x16x16xf32>
      %48 = vector.shape_cast %47 : vector<1x16x16xf32> to vector<16x16xf32>
      %cst_49 = arith.constant dense<0.000000e+00> : vector<16x16xf32>
      %49 = tpu.matmul %46, %48, %cst_49 {dimension_numbers = #tpu.dot_dimension_numbers<[1], [0], [0], [1], [0, 0, 1, 1], [], []>} : vector<16x16xf32>, vector<16x16xf32>, vector<16x16xf32> -> vector<16x16xf32>
      %50 = arith.addf %44, %49 : vector<16x16xf32>
      %c0_50 = arith.constant 0 : index
      %c2 = arith.constant 2 : index
      %c0_51 = arith.constant 0 : index
      %51 = vector.load %arg7[%c0_50, %c2, %c0_51] : memref<2x22x16xf32, #tpu.memory_space<vmem>>, vector<1x16x16xf32>
      %52 = vector.shape_cast %51 : vector<1x16x16xf32> to vector<16x16xf32>
      %c2_52 = arith.constant 2 : index
      %c0_53 = arith.constant 0 : index
      %c0_54 = arith.constant 0 : index
      %53 = vector.load %arg3[%c2_52, %c0_53, %c0_54] : memref<14x16x16xf32, #tpu.memory_space<vmem>>, vector<1x16x16xf32>
      %54 = vector.shape_cast %53 : vector<1x16x16xf32> to vector<16x16xf32>
      %cst_55 = arith.constant dense<0.000000e+00> : vector<16x16xf32>
      %55 = tpu.matmul %52, %54, %cst_55 {dimension_numbers = #tpu.dot_dimension_numbers<[1], [0], [0], [1], [0, 0, 1, 1], [], []>} : vector<16x16xf32>, vector<16x16xf32>, vector<16x16xf32> -> vector<16x16xf32>
      %56 = arith.addf %50, %55 : vector<16x16xf32>
      %c0_56 = arith.constant 0 : index
      %c3_57 = arith.constant 3 : index
      %c0_58 = arith.constant 0 : index
      %57 = vector.load %arg7[%c0_56, %c3_57, %c0_58] : memref<2x22x16xf32, #tpu.memory_space<vmem>>, vector<1x16x16xf32>
      %58 = vector.shape_cast %57 : vector<1x16x16xf32> to vector<16x16xf32>
      %c3_59 = arith.constant 3 : index
      %c0_60 = arith.constant 0 : index
      %c0_61 = arith.constant 0 : index
      %59 = vector.load %arg3[%c3_59, %c0_60, %c0_61] : memref<14x16x16xf32, #tpu.memory_space<vmem>>, vector<1x16x16xf32>
      %60 = vector.shape_cast %59 : vector<1x16x16xf32> to vector<16x16xf32>
      %cst_62 = arith.constant dense<0.000000e+00> : vector<16x16xf32>
      %61 = tpu.matmul %58, %60, %cst_62 {dimension_numbers = #tpu.dot_dimension_numbers<[1], [0], [0], [1], [0, 0, 1, 1], [], []>} : vector<16x16xf32>, vector<16x16xf32>, vector<16x16xf32> -> vector<16x16xf32>
      %62 = arith.addf %56, %61 : vector<16x16xf32>
      %c0_63 = arith.constant 0 : index
      %c4 = arith.constant 4 : index
      %c0_64 = arith.constant 0 : index
      %63 = vector.load %arg7[%c0_63, %c4, %c0_64] : memref<2x22x16xf32, #tpu.memory_space<vmem>>, vector<1x16x16xf32>
      %64 = vector.shape_cast %63 : vector<1x16x16xf32> to vector<16x16xf32>
      %c4_65 = arith.constant 4 : index
      %c0_66 = arith.constant 0 : index
      %c0_67 = arith.constant 0 : index
      %65 = vector.load %arg3[%c4_65, %c0_66, %c0_67] : memref<14x16x16xf32, #tpu.memory_space<vmem>>, vector<1x16x16xf32>
      %66 = vector.shape_cast %65 : vector<1x16x16xf32> to vector<16x16xf32>
      %cst_68 = arith.constant dense<0.000000e+00> : vector<16x16xf32>
      %67 = tpu.matmul %64, %66, %cst_68 {dimension_numbers = #tpu.dot_dimension_numbers<[1], [0], [0], [1], [0, 0, 1, 1], [], []>} : vector<16x16xf32>, vector<16x16xf32>, vector<16x16xf32> -> vector<16x16xf32>
      %68 = arith.addf %62, %67 : vector<16x16xf32>
      %c0_69 = arith.constant 0 : index
      %c5 = arith.constant 5 : index
      %c0_70 = arith.constant 0 : index
      %69 = vector.load %arg7[%c0_69, %c5, %c0_70] : memref<2x22x16xf32, #tpu.memory_space<vmem>>, vector<1x16x16xf32>
      %70 = vector.shape_cast %69 : vector<1x16x16xf32> to vector<16x16xf32>
      %c5_71 = arith.constant 5 : index
      %c0_72 = arith.constant 0 : index
      %c0_73 = arith.constant 0 : index
      %71 = vector.load %arg3[%c5_71, %c0_72, %c0_73] : memref<14x16x16xf32, #tpu.memory_space<vmem>>, vector<1x16x16xf32>
      %72 = vector.shape_cast %71 : vector<1x16x16xf32> to vector<16x16xf32>
      %cst_74 = arith.constant dense<0.000000e+00> : vector<16x16xf32>
      %73 = tpu.matmul %70, %72, %cst_74 {dimension_numbers = #tpu.dot_dimension_numbers<[1], [0], [0], [1], [0, 0, 1, 1], [], []>} : vector<16x16xf32>, vector<16x16xf32>, vector<16x16xf32> -> vector<16x16xf32>
      %74 = arith.addf %68, %73 : vector<16x16xf32>
      %c0_75 = arith.constant 0 : index
      %c6 = arith.constant 6 : index
      %c0_76 = arith.constant 0 : index
      %75 = vector.load %arg7[%c0_75, %c6, %c0_76] : memref<2x22x16xf32, #tpu.memory_space<vmem>>, vector<1x16x16xf32>
      %76 = vector.shape_cast %75 : vector<1x16x16xf32> to vector<16x16xf32>
      %c6_77 = arith.constant 6 : index
      %c0_78 = arith.constant 0 : index
      %c0_79 = arith.constant 0 : index
      %77 = vector.load %arg3[%c6_77, %c0_78, %c0_79] : memref<14x16x16xf32, #tpu.memory_space<vmem>>, vector<1x16x16xf32>
      %78 = vector.shape_cast %77 : vector<1x16x16xf32> to vector<16x16xf32>
      %cst_80 = arith.constant dense<0.000000e+00> : vector<16x16xf32>
      %79 = tpu.matmul %76, %78, %cst_80 {dimension_numbers = #tpu.dot_dimension_numbers<[1], [0], [0], [1], [0, 0, 1, 1], [], []>} : vector<16x16xf32>, vector<16x16xf32>, vector<16x16xf32> -> vector<16x16xf32>
      %80 = arith.addf %74, %79 : vector<16x16xf32>
      %c1_81 = arith.constant 1 : index
      %c0_82 = arith.constant 0 : index
      %c0_83 = arith.constant 0 : index
      %81 = vector.load %arg7[%c1_81, %c0_82, %c0_83] : memref<2x22x16xf32, #tpu.memory_space<vmem>>, vector<1x16x16xf32>
      %82 = vector.shape_cast %81 : vector<1x16x16xf32> to vector<16x16xf32>
      %c7 = arith.constant 7 : index
      %c0_84 = arith.constant 0 : index
      %c0_85 = arith.constant 0 : index
      %83 = vector.load %arg3[%c7, %c0_84, %c0_85] : memref<14x16x16xf32, #tpu.memory_space<vmem>>, vector<1x16x16xf32>
      %84 = vector.shape_cast %83 : vector<1x16x16xf32> to vector<16x16xf32>
      %cst_86 = arith.constant dense<0.000000e+00> : vector<16x16xf32>
      %85 = tpu.matmul %82, %84, %cst_86 {dimension_numbers = #tpu.dot_dimension_numbers<[1], [0], [0], [1], [0, 0, 1, 1], [], []>} : vector<16x16xf32>, vector<16x16xf32>, vector<16x16xf32> -> vector<16x16xf32>
      %86 = arith.addf %80, %85 : vector<16x16xf32>
      %c1_87 = arith.constant 1 : index
      %c1_88 = arith.constant 1 : index
      %c0_89 = arith.constant 0 : index
      %87 = vector.load %arg7[%c1_87, %c1_88, %c0_89] : memref<2x22x16xf32, #tpu.memory_space<vmem>>, vector<1x16x16xf32>
      %88 = vector.shape_cast %87 : vector<1x16x16xf32> to vector<16x16xf32>
      %c8 = arith.constant 8 : index
      %c0_90 = arith.constant 0 : index
      %c0_91 = arith.constant 0 : index
      %89 = vector.load %arg3[%c8, %c0_90, %c0_91] : memref<14x16x16xf32, #tpu.memory_space<vmem>>, vector<1x16x16xf32>
      %90 = vector.shape_cast %89 : vector<1x16x16xf32> to vector<16x16xf32>
      %cst_92 = arith.constant dense<0.000000e+00> : vector<16x16xf32>
      %91 = tpu.matmul %88, %90, %cst_92 {dimension_numbers = #tpu.dot_dimension_numbers<[1], [0], [0], [1], [0, 0, 1, 1], [], []>} : vector<16x16xf32>, vector<16x16xf32>, vector<16x16xf32> -> vector<16x16xf32>
      %92 = arith.addf %86, %91 : vector<16x16xf32>
      %c1_93 = arith.constant 1 : index
      %c2_94 = arith.constant 2 : index
      %c0_95 = arith.constant 0 : index
      %93 = vector.load %arg7[%c1_93, %c2_94, %c0_95] : memref<2x22x16xf32, #tpu.memory_space<vmem>>, vector<1x16x16xf32>
      %94 = vector.shape_cast %93 : vector<1x16x16xf32> to vector<16x16xf32>
      %c9 = arith.constant 9 : index
      %c0_96 = arith.constant 0 : index
      %c0_97 = arith.constant 0 : index
      %95 = vector.load %arg3[%c9, %c0_96, %c0_97] : memref<14x16x16xf32, #tpu.memory_space<vmem>>, vector<1x16x16xf32>
      %96 = vector.shape_cast %95 : vector<1x16x16xf32> to vector<16x16xf32>
      %cst_98 = arith.constant dense<0.000000e+00> : vector<16x16xf32>
      %97 = tpu.matmul %94, %96, %cst_98 {dimension_numbers = #tpu.dot_dimension_numbers<[1], [0], [0], [1], [0, 0, 1, 1], [], []>} : vector<16x16xf32>, vector<16x16xf32>, vector<16x16xf32> -> vector<16x16xf32>
      %98 = arith.addf %92, %97 : vector<16x16xf32>
      %c1_99 = arith.constant 1 : index
      %c3_100 = arith.constant 3 : index
      %c0_101 = arith.constant 0 : index
      %99 = vector.load %arg7[%c1_99, %c3_100, %c0_101] : memref<2x22x16xf32, #tpu.memory_space<vmem>>, vector<1x16x16xf32>
      %100 = vector.shape_cast %99 : vector<1x16x16xf32> to vector<16x16xf32>
      %c10 = arith.constant 10 : index
      %c0_102 = arith.constant 0 : index
      %c0_103 = arith.constant 0 : index
      %101 = vector.load %arg3[%c10, %c0_102, %c0_103] : memref<14x16x16xf32, #tpu.memory_space<vmem>>, vector<1x16x16xf32>
      %102 = vector.shape_cast %101 : vector<1x16x16xf32> to vector<16x16xf32>
      %cst_104 = arith.constant dense<0.000000e+00> : vector<16x16xf32>
      %103 = tpu.matmul %100, %102, %cst_104 {dimension_numbers = #tpu.dot_dimension_numbers<[1], [0], [0], [1], [0, 0, 1, 1], [], []>} : vector<16x16xf32>, vector<16x16xf32>, vector<16x16xf32> -> vector<16x16xf32>
      %104 = arith.addf %98, %103 : vector<16x16xf32>
      %c1_105 = arith.constant 1 : index
      %c4_106 = arith.constant 4 : index
      %c0_107 = arith.constant 0 : index
      %105 = vector.load %arg7[%c1_105, %c4_106, %c0_107] : memref<2x22x16xf32, #tpu.memory_space<vmem>>, vector<1x16x16xf32>
      %106 = vector.shape_cast %105 : vector<1x16x16xf32> to vector<16x16xf32>
      %c11 = arith.constant 11 : index
      %c0_108 = arith.constant 0 : index
      %c0_109 = arith.constant 0 : index
      %107 = vector.load %arg3[%c11, %c0_108, %c0_109] : memref<14x16x16xf32, #tpu.memory_space<vmem>>, vector<1x16x16xf32>
      %108 = vector.shape_cast %107 : vector<1x16x16xf32> to vector<16x16xf32>
      %cst_110 = arith.constant dense<0.000000e+00> : vector<16x16xf32>
      %109 = tpu.matmul %106, %108, %cst_110 {dimension_numbers = #tpu.dot_dimension_numbers<[1], [0], [0], [1], [0, 0, 1, 1], [], []>} : vector<16x16xf32>, vector<16x16xf32>, vector<16x16xf32> -> vector<16x16xf32>
      %110 = arith.addf %104, %109 : vector<16x16xf32>
      %c1_111 = arith.constant 1 : index
      %c5_112 = arith.constant 5 : index
      %c0_113 = arith.constant 0 : index
      %111 = vector.load %arg7[%c1_111, %c5_112, %c0_113] : memref<2x22x16xf32, #tpu.memory_space<vmem>>, vector<1x16x16xf32>
      %112 = vector.shape_cast %111 : vector<1x16x16xf32> to vector<16x16xf32>
      %c12 = arith.constant 12 : index
      %c0_114 = arith.constant 0 : index
      %c0_115 = arith.constant 0 : index
      %113 = vector.load %arg3[%c12, %c0_114, %c0_115] : memref<14x16x16xf32, #tpu.memory_space<vmem>>, vector<1x16x16xf32>
      %114 = vector.shape_cast %113 : vector<1x16x16xf32> to vector<16x16xf32>
      %cst_116 = arith.constant dense<0.000000e+00> : vector<16x16xf32>
      %115 = tpu.matmul %112, %114, %cst_116 {dimension_numbers = #tpu.dot_dimension_numbers<[1], [0], [0], [1], [0, 0, 1, 1], [], []>} : vector<16x16xf32>, vector<16x16xf32>, vector<16x16xf32> -> vector<16x16xf32>
      %116 = arith.addf %110, %115 : vector<16x16xf32>
      %c1_117 = arith.constant 1 : index
      %c6_118 = arith.constant 6 : index
      %c0_119 = arith.constant 0 : index
      %117 = vector.load %arg7[%c1_117, %c6_118, %c0_119] : memref<2x22x16xf32, #tpu.memory_space<vmem>>, vector<1x16x16xf32>
      %118 = vector.shape_cast %117 : vector<1x16x16xf32> to vector<16x16xf32>
      %c13 = arith.constant 13 : index
      %c0_120 = arith.constant 0 : index
      %c0_121 = arith.constant 0 : index
      %119 = vector.load %arg3[%c13, %c0_120, %c0_121] : memref<14x16x16xf32, #tpu.memory_space<vmem>>, vector<1x16x16xf32>
      %120 = vector.shape_cast %119 : vector<1x16x16xf32> to vector<16x16xf32>
      %cst_122 = arith.constant dense<0.000000e+00> : vector<16x16xf32>
      %121 = tpu.matmul %118, %120, %cst_122 {dimension_numbers = #tpu.dot_dimension_numbers<[1], [0], [0], [1], [0, 0, 1, 1], [], []>} : vector<16x16xf32>, vector<16x16xf32>, vector<16x16xf32> -> vector<16x16xf32>
      %122 = arith.addf %116, %121 : vector<16x16xf32>
      %123 = arith.negf %122 : vector<16x16xf32>
      %124 = math.exp %123 : vector<16x16xf32>
      %cst_123 = arith.constant 1.000000e+00 : f32
      %125 = vector.broadcast %cst_123 : f32 to vector<16x16xf32>
      %126 = arith.addf %125, %124 : vector<16x16xf32>
      %127 = arith.divf %125, %126 : vector<16x16xf32>
      %c0_124 = arith.constant 0 : index
      %c0_125 = arith.constant 0 : index
      %c0_126 = arith.constant 0 : index
      %128 = vector.load %arg4[%c0_124, %c0_125, %c0_126] : memref<1x16x16xf32, #tpu.memory_space<vmem>>, vector<1x16x16xf32>
      %129 = vector.shape_cast %128 : vector<1x16x16xf32> to vector<16x16xf32>
      %130 = vector.shape_cast %127 : vector<16x16xf32> to vector<1x16x16xf32>
      tpu.vector_store %arg4[%c0_124, %c0_125, %c0_126], %130 {strides = array<i32>} : memref<1x16x16xf32, #tpu.memory_space<vmem>>, vector<1x16x16xf32>,
    } else {
    }
    return
  }
  func.func @transform_0(%arg0: i32, %arg1: i32) -> (i32, i32, i32, i32) {
    %c0_i32 = arith.constant 0 : i32
    %c0_i32_0 = arith.constant 0 : i32
    %c0_i32_1 = arith.constant 0 : i32
    return %arg0, %arg1, %c0_i32, %c0_i32_0 : i32, i32, i32, i32
  }
  func.func @transform_1(%arg0: i32, %arg1: i32) -> (i32, i32, i32) {
    %c0_i32 = arith.constant 0 : i32
    %c0_i32_0 = arith.constant 0 : i32
    %c0_i32_1 = arith.constant 0 : i32
    %c0_i32_2 = arith.constant 0 : i32
    return %c0_i32, %c0_i32_0, %c0_i32_1 : i32, i32, i32
  }
  func.func @transform_2(%arg0: i32, %arg1: i32) -> (i32, i32, i32) {
    %c0_i32 = arith.constant 0 : i32
    %c0_i32_0 = arith.constant 0 : i32
    %c0_i32_1 = arith.constant 0 : i32
    return %arg0, %c0_i32, %c0_i32_0 : i32, i32, i32
  }
}

</mosaic_0001>

<llo_original>
// kernel: tpu_custom_call.1
$region0: #{tpu_custom_call.1}
  #allocation0 [shape = 'u32[]', space=smem, size = 0x4, offset = 0x4, fixed_abs, tag = 'smem constant byte address 0x4 - core index']
  #allocation1 [shape = 'u32[144,128]{1,0:T(1,128)}', space=vmem, size = 0x12000, scoped, tag = 'internal scratch']
  #allocation2 [shape = 'f32[16,16]{1,0:T(8,128)}', space=vmem, size = 0x2000, scoped, tag = 'scratch operand']
  #allocation3 [shape = 'f32[16,16]{1,0:T(8,128)}', space=vmem, size = 0x2000, scoped, tag = 'scratch operand']
  #allocation4 [shape = 'f32[2,22,16]{2,1,0:T(8,128)}', space=vmem, size = 0x6000, scoped, tag = 'scratch operand']
  %s0 = inlined_call_operand.hbm [shape: f32[2,4,16,16], index: 0, kind: input, shape index: {}]
  %s1 = inlined_call_operand.hbm [shape: f32[14,16,16], index: 1, kind: input, shape index: {}]
  %s2 = inlined_call_operand.hbm [shape: f32[2,16,16], index: 2, kind: output, shape index: {}]
  %s3 = sld [smem:[#allocation0]]
  $region57: #{tpu_custom_call.1} parent=0
    _
  %s5 = ssub.s32 1, %s3
  %s6 = scalar_select 0, %s5, %s3
  $region1: #{tpu_custom_call.1} parent=0
    #allocation5 [shape = 'u8[65536]{0}', space=vmem, size = 0x10000, scoped, tag = 'input window, operand 0']
    #allocation6 [shape = 's32[2]{0}', space=sflag, size = 0x8, scoped, tag = 'scoped memory for tpu_custom_call.1']
    #allocation7 [shape = 's32[2]{0}', space=sflag, size = 0x8, scoped, tag = 'scoped memory for tpu_custom_call.1']
    #allocation8 [shape = 'u8[114688]{0}', space=vmem, size = 0x1c000, scoped, tag = 'input window, operand 1, single buffered']
    #allocation9 [shape = 's32[1]{0}', space=sflag, size = 0x4, scoped, tag = 'scoped memory for tpu_custom_call.1']
    #allocation10 [shape = 'u8[16384]{0}', space=vmem, size = 0x4000, scoped, tag = 'output window, operand 0']
    %7 = vsyncpa [#allocation6], 0
    %s8 = scalar_lea.sflag [#allocation6], 1
    %9 = vsyncpa %s8, 0
    %10 = vsyncpa [#allocation9], 0
    %11 = vsyncpa [#allocation7], 0
    %s12 = scalar_lea.sflag [#allocation7], 1
    %13 = vsyncpa %s12, 0
    loop: start=0, step=1, limit=4
    $region2: #{tpu_custom_call.1} parent=1 // loop_pre_header
      _
    $region3: #{tpu_custom_call.1} parent=1 // loop_header
      %s15 = sphi 0, %s19
      %p16 = scmp.ge.s32.totalorder %s15, 4
      %s22 = sphi 0, %s34
      %s23 = sphi 0, %s30
      %s24 = sphi 0, %s22
      %s25 = sphi 0, %s23
      %s26 = sphi 0, %s24
      %s27 = sphi 0, %s25
      %s39 = sphi 0, %s41
      %s42 = sphi 0, %s39
      %s43 = sphi 0, %s42
      %s59 = sphi 0, %s43
      %s63 = sphi 0, %s63
      %s65 = sphi 0, %s63
      %s66 = sphi 0, %s65
      %s80 = sphi 0, %s66
      %s86 = sphi 0, %s88
      %s89 = sphi 0, %s86
      %s90 = sphi 0, %s89
      %s106 = sphi 0, %s90
    $region4: #{tpu_custom_call.1} parent=1 // loop_header_branch
      %18 = sbr.rel (%p16) target = $region8
    $region5: #{tpu_custom_call.1} parent=1 // loop_body
      %s20 = ssub.s32 %s15, 1
      %s21 = ssub.s32 %s15, 2
      %s28 = sadd.s32 1, %s23
      %p29 = scmp.ge.s32.totalorder %s28, 1
      %s30 = scalar_select %p29, 0, %s28
      %s31 = sadd.s32 1, %s22
      %s32 = scalar_select %p29, %s31, %s22
      %p33 = scmp.ge.s32.totalorder %s32, 2
      %s34 = scalar_select %p33, 0, %s32
      %s35 = ssub.s32 %s22, %s34
      %s36 = ssub.s32 %s23, %s30
      %s37 = sor.u32 %s35, %s36
      %p38 = scmp.eq.s32.totalorder %s37, 0
      %s40 = sadd.s32 %s39, 1
      %s41 = scalar_select %p38, %s39, %s40
      %p44 = pneg %p38
      %p45 = scmp.eq.s32.totalorder %s15, 1
      %p46 = por %p44, %p45
      %p47 = scmp.ne.s32.totalorder %s39, %s42
      %p48 = scmp.eq.s32.totalorder %s15, 0
      %p49 = por %p47, %p48
      %p50 = scmp.ne.s32.totalorder %s39, %s42
      %p51 = scmp.eq.s32.totalorder %s20, 1
      %p52 = por %p50, %p51
      %p53 = scmp.ne.s32.totalorder %s42, %s43
      %p54 = scmp.eq.s32.totalorder %s20, 0
      %p55 = por %p53, %p54
      %p56 = scmp.ne.s32.totalorder %s42, %s43
      %p57 = scmp.eq.s32.totalorder %s21, 1
      %p58 = por %p56, %p57
      %p60 = scmp.ne.s32.totalorder %s43, %s59
      %p61 = scmp.eq.s32.totalorder %s21, 0
      %p62 = por %p60, %p61
      %s64 = sadd.s32 %s63, 1
      %p67 = scmp.eq.s32.totalorder %s15, 1
      %p68 = scmp.ne.s32.totalorder %s63, %s65
      %p69 = scmp.eq.s32.totalorder %s15, 0
      %p70 = por %p68, %p69
      %p71 = scmp.ne.s32.totalorder %s63, %s65
      %p72 = scmp.eq.s32.totalorder %s20, 1
      %p73 = por %p71, %p72
      %p74 = scmp.ne.s32.totalorder %s65, %s66
      %p75 = scmp.eq.s32.totalorder %s20, 0
      %p76 = por %p74, %p75
      %p77 = scmp.ne.s32.totalorder %s65, %s66
      %p78 = scmp.eq.s32.totalorder %s21, 1
      %p79 = por %p77, %p78
      %p81 = scmp.ne.s32.totalorder %s66, %s80
      %p82 = scmp.eq.s32.totalorder %s21, 0
      %p83 = por %p81, %p82
      %s84 = ssub.s32 %s22, %s34
      %p85 = scmp.eq.s32.totalorder %s84, 0
      %s87 = sadd.s32 %s86, 1
      %s88 = scalar_select %p85, %s86, %s87
      %p91 = pneg %p85
      %p92 = scmp.eq.s32.totalorder %s15, 1
      %p93 = por %p91, %p92
      %p94 = scmp.ne.s32.totalorder %s86, %s89
      %p95 = scmp.eq.s32.totalorder %s15, 0
      %p96 = por %p94, %p95
      %p97 = scmp.ne.s32.totalorder %s86, %s89
      %p98 = scmp.eq.s32.totalorder %s20, 1
      %p99 = por %p97, %p98
      %p100 = scmp.ne.s32.totalorder %s89, %s90
      %p101 = scmp.eq.s32.totalorder %s20, 0
      %p102 = por %p100, %p101
      %p103 = scmp.ne.s32.totalorder %s89, %s90
      %p104 = scmp.eq.s32.totalorder %s21, 1
      %p105 = por %p103, %p104
      %p107 = scmp.ne.s32.totalorder %s90, %s106
      %p108 = scmp.eq.s32.totalorder %s21, 0
      %p109 = por %p107, %p108
      %p110 = scmp.le.s32.totalorder 1, %s15
      %p111 = scmp.lt.s32.totalorder %s15, 3
      %p112 = pnand %p110, %p111
      %p113 = pneg %p112
      // Predicated region
      $region9: #{tpu_custom_call.1} parent=5 // pred_check
        _
      $region10: #{tpu_custom_call.1} parent=5 // pred_check_branch
        %115 = sbr.rel (%p112) target = $region12
      $region11: #{tpu_custom_call.1} parent=5 // pred_region
        %s116 = ssub.s32 %s15, 1
        // Predicated region
        $region13: #{tpu_custom_call.1} parent=11 // pred_check
          %p117 = pneg %p76
        $region14: #{tpu_custom_call.1} parent=11 // pred_check_branch
          %119 = sbr.rel (%p117) target = $region16
        $region15: #{tpu_custom_call.1} parent=11 // pred_region
          %s121 = ssub.s32 3584, 3584
          %122 = vsyncadd [#allocation9], %s121
          %s123 = sshll.u32 [#allocation8], 4
          %s124 = int_to_ptr.vmem [resolvable:$true] %s123
          %129 = dma.hbm_to_vmem [thread:$0]  %s1, 3584, %s124, [#allocation9], 128, 128, 8
        $region16: #{tpu_custom_call.1} parent=11 // pred_fallthru
          _
      $region12: #{tpu_custom_call.1} parent=5 // pred_fallthru
        _
      %p130 = scmp.lt.s32.totalorder %s15, 2
      // Predicated region
      $region17: #{tpu_custom_call.1} parent=5 // pred_check
        %p131 = pneg %p130
      $region18: #{tpu_custom_call.1} parent=5 // pred_check_branch
        %133 = sbr.rel (%p131) target = $region20
      $region19: #{tpu_custom_call.1} parent=5 // pred_region
        // Predicated region
        $region21: #{tpu_custom_call.1} parent=19 // pred_check
          %p134 = pneg %p49
        $region22: #{tpu_custom_call.1} parent=19 // pred_check_branch
          %136 = sbr.rel (%p134) target = $region24
        $region23: #{tpu_custom_call.1} parent=19 // pred_region
          %s137 = sand.u32 %s39, 1
          %s138 = scalar_lea.sflag [#allocation6], %s137
          %s139 = sand.u32 %s39, 1
          %s140 = smul.addr %s139, 64
          %s141 = scalar_lea.vmem [#allocation5], %s140
          %s142 = smul.u32 4, %s23
          %s144 = ssub.s32 1024, 1024
          %145 = vsyncadd %s138, %s144
          %s146 = smul.addr %s142, 2
          %s147 = smul.addr %s22, 8
          %s148 = sadd.s32 %s146, %s147
          %s149 = smul.addr %s148, 128
          %s150 = scalar_lea.hbm %s0, %s149
          %s151 = sshll.u32 %s141, 4
          %s152 = int_to_ptr.vmem [resolvable:$true] %s151
          %157 = dma.hbm_to_vmem [thread:$0]  %s150, 1024, %s152, %s138, 128, 128, 8
        $region24: #{tpu_custom_call.1} parent=19 // pred_fallthru
          _
      $region20: #{tpu_custom_call.1} parent=5 // pred_fallthru
        _
      %p158 = scmp.le.s32.totalorder 1, %s15
      %p159 = scmp.lt.s32.totalorder %s15, 3
      %p160 = pnand %p158, %p159
      %p161 = pneg %p160
      // Predicated region
      $region25: #{tpu_custom_call.1} parent=5 // pred_check
        _
      $region26: #{tpu_custom_call.1} parent=5 // pred_check_branch
        %163 = sbr.rel (%p160) target = $region28
      $region27: #{tpu_custom_call.1} parent=5 // pred_region
        %s164 = ssub.s32 %s15, 1
        %s165 = sand.u32 %s42, 1
        %s166 = scalar_lea.sflag [#allocation6], %s165
        %s167 = sand.u32 %s42, 1
        %s168 = smul.addr %s167, 64
        %s169 = scalar_lea.vmem [#allocation5], %s168
        // Predicated region
        $region29: #{tpu_custom_call.1} parent=27 // pred_check
          %p170 = pneg %p55
        $region30: #{tpu_custom_call.1} parent=27 // pred_check_branch
          %172 = sbr.rel (%p170) target = $region32
        $region31: #{tpu_custom_call.1} parent=27 // pred_region
          %173 = dma.done %s166, 1024
        $region32: #{tpu_custom_call.1} parent=27 // pred_fallthru
          _
        // Predicated region
        $region33: #{tpu_custom_call.1} parent=27 // pred_check
          %p174 = pneg %p76
        $region34: #{tpu_custom_call.1} parent=27 // pred_check_branch
          %176 = sbr.rel (%p174) target = $region36
        $region35: #{tpu_custom_call.1} parent=27 // pred_region
          %177 = dma.done [#allocation9], 3584
        $region36: #{tpu_custom_call.1} parent=27 // pred_fallthru
          _
        %s178 = sand.u32 %s42, 1
        %s179 = scalar_lea.sflag [#allocation6], %s178
        %s180 = sand.u32 %s42, 1
        %s181 = smul.addr %s180, 64
        %s182 = scalar_lea.vmem [#allocation5], %s181
        %p183 = pneg %p55
        %p184 = pneg %p52
        %p185 = pneg %p76
        %p186 = pneg %p73
        %p187 = pneg %p102
        %p188 = pneg %p99
        %s189 = sand.u32 %s89, 1
        %s190 = scalar_lea.sflag [#allocation7], %s189
        %s191 = sand.u32 %s89, 1
        %s192 = smul.addr %s191, 16
        %s193 = scalar_lea.vmem [#allocation10], %s192
        %s194 = smul.u32 4, %s25
        %v195 = vld [vmem:[%s169] sm:$0xff]
        %v196 = vld [vmem:[%s169 + $0x8] sm:$0xff]
        %v197 = vld [vmem:[%s169 + $0x10] sm:$0xff]
        %v198 = vld [vmem:[%s169 + $0x18] sm:$0xff]
        %v199 = vld [vmem:[%s169 + $0x20] sm:$0xff]
        %v200 = vld [vmem:[%s169 + $0x28] sm:$0xff]
        %v201 = vld [vmem:[%s169 + $0x30] sm:$0xff]
        %v202 = vld [vmem:[%s169 + $0x38] sm:$0xff]
        %vm203 = vcmask 130048
        %v204 = vsel %vm203, %v195, 0.0
        %v205 = vsel %vm203, %v197, 0.0
        %v206 = vadd.f32 %v204, %v205
        %v207 = vsel %vm203, %v199, 0.0
        %v208 = vadd.f32 %v206, %v207
        %v209 = vsel %vm203, %v201, 0.0
        %v210 = vadd.f32 %v208, %v209
        %v211 = vsel %vm203, %v196, 0.0
        %v212 = vsel %vm203, %v198, 0.0
        %v213 = vadd.f32 %v211, %v212
        %v214 = vsel %vm203, %v200, 0.0
        %v215 = vadd.f32 %v213, %v214
        %v216 = vsel %vm203, %v202, 0.0
        %v217 = vadd.f32 %v215, %v216
        %v218 = vsel %vm203, %v195, -inf
        %v219 = vsel %vm203, %v197, -inf
        %v220 = vsel %vm203, %v199, -inf
        %v221 = vmax.f32 %v218, %v220
        %v222 = vsel %vm203, %v201, -inf
        %v223 = vmax.f32 %v219, %v222
        %v224 = vmax.f32 %v221, %v223
        %v225 = vsel %vm203, %v196, -inf
        %v226 = vsel %vm203, %v198, -inf
        %v227 = vsel %vm203, %v200, -inf
        %v228 = vmax.f32 %v225, %v227
        %v229 = vsel %vm203, %v202, -inf
        %v230 = vmax.f32 %v226, %v229
        %v231 = vmax.f32 %v228, %v230
        %p232 = scmp.eq.s32.totalorder %s25, 0
        // Predicated region
        $region37: #{tpu_custom_call.1} parent=27 // pred_check
          %p233 = pneg %p232
        $region38: #{tpu_custom_call.1} parent=27 // pred_check_branch
          %235 = sbr.rel (%p233) target = $region40
        $region39: #{tpu_custom_call.1} parent=27 // pred_region
          %236 = vst.msk [vmem:[#allocation2] sm:$0xff] %vm203, 0.0
          %237 = vst.msk [vmem:[#allocation2 + $0x8] sm:$0xff] %vm203, 0.0
          %238 = vst.msk [vmem:[#allocation3] sm:$0xff] %vm203, -inf
          %239 = vst.msk [vmem:[#allocation3 + $0x8] sm:$0xff] %vm203, -inf
        $region40: #{tpu_custom_call.1} parent=27 // pred_fallthru
          _
        %v240 = vld [vmem:[#allocation2] sm:$0xff]
        %v241 = vld [vmem:[#allocation2 + $0x8] sm:$0xff]
        %v242 = vadd.f32 %v240, %v210
        %v243 = vadd.f32 %v241, %v217
        %244 = vst.msk [vmem:[#allocation2] sm:$0xff] %vm203, %v242
        %245 = vst.msk [vmem:[#allocation2 + $0x8] sm:$0xff] %vm203, %v243
        %v246 = vld [vmem:[#allocation3] sm:$0xff]
        %v247 = vld [vmem:[#allocation3 + $0x8] sm:$0xff]
        %v248 = vmax.f32 %v246, %v224
        %v249 = vmax.f32 %v247, %v231
        %250 = vst.msk [vmem:[#allocation3] sm:$0xff] %vm203, %v248
        %251 = vst.msk [vmem:[#allocation3 + $0x8] sm:$0xff] %vm203, %v249
        // Predicated region
        $region41: #{tpu_custom_call.1} parent=27 // pred_check
          %p252 = pneg %p232
        $region42: #{tpu_custom_call.1} parent=27 // pred_check_branch
          %254 = sbr.rel (%p252) target = $region44
        $region43: #{tpu_custom_call.1} parent=27 // pred_region
          %vm255 = vcmask 124928
          %256 = vst.msk [vmem:[#allocation4] sm:$0x7] %vm255, 0.0
          %257 = vst.msk [vmem:[#allocation4 + $0x13] sm:$0x7] %vm255, 0.0
          %s258 = scalar_lea.vmem [#allocation4], 24
          %259 = vst.msk [vmem:[%s258] sm:$0x7] %vm255, 0.0
          %260 = vst.msk [vmem:[%s258 + $0x13] sm:$0x7] %vm255, 0.0
          %v261 = vld [vmem:[#allocation2] sm:$0xff]
          %v262 = vld [vmem:[#allocation2 + $0x8] sm:$0xff]
          %263 = vst.msk [vmem:[#allocation4 + $0x3] sm:$0xff] %vm203, %v261
          %264 = vst.msk [vmem:[#allocation4 + $0xb] sm:$0xff] %vm203, %v262
          %v265 = vld [vmem:[#allocation3] sm:$0xff]
          %v266 = vld [vmem:[#allocation3 + $0x8] sm:$0xff]
          %267 = vst.msk [vmem:[%s258 + $0x3] sm:$0xff] %vm203, %v265
          %268 = vst.msk [vmem:[%s258 + $0xb] sm:$0xff] %vm203, %v266
          %v269 = vld [vmem:[#allocation4] sm:$0xff]
          %v270 = vld [vmem:[#allocation4 + $0x8] sm:$0xff]
          %v271 = vld [vmem:[#allocation8] sm:$0xff]
          %v272 = vld [vmem:[#allocation8 + $0x8] sm:$0xff]
          %v273 = vld [vmem:[#allocation4 + $0x1] sm:$0xff]
          %v274 = vld [vmem:[#allocation4 + $0x9] sm:$0xff]
          %s275 = scalar_lea.vmem [#allocation8], 16
          %v276 = vld [vmem:[%s275] sm:$0xff]
          %v277 = vld [vmem:[%s275 + $0x8] sm:$0xff]
          %v279 = vsel %vm203, %v273, 0
          %v282 = vsel %vm203, %v274, 0
          %284 = vmatprep.subr.mxu0 0.0
          %285 = vmatpush1.msra.mxu0 %v276
          %286 = vmatprep.subr.mxu0 0.0
          %287 = vmatpush1.msra.mxu0 %v277
          %288 = vmatprep.subr.mxu0 0.0
          %289 = vmatpush1.msra.mxu0 0.0
          %290 = vmatprep.subr.mxu0 0.0
          %291 = vmatpush1.msra.mxu0 0.0
          %292 = vmatprep.subr.mxu0 0.0
          %293 = vmatpush1.msra.mxu0 0.0
          %294 = vmatprep.subr.mxu0 0.0
          %295 = vmatpush1.msra.mxu0 0.0
          %296 = vmatprep.subr.mxu0 0.0
          %297 = vmatpush1.msra.mxu0 0.0
          %298 = vmatprep.subr.mxu0 0.0
          %299 = vmatpush1.msra.mxu0 0.0
          %300 = vmatprep.subr.mxu0 0.0
          %301 = vmatpush1.msra.mxu0 0.0
          %302 = vmatprep.subr.mxu0 0.0
          %303 = vmatpush1.msra.mxu0 0.0
          %304 = vmatprep.subr.mxu0 0.0
          %305 = vmatpush1.msra.mxu0 0.0
          %306 = vmatprep.subr.mxu0 0.0
          %307 = vmatpush1.msra.mxu0 0.0
          %308 = vmatprep.subr.mxu0 0.0
          %309 = vmatpush1.msra.mxu0 0.0
          %310 = vmatprep.subr.mxu0 0.0
          %311 = vmatpush1.msra.mxu0 0.0
          %312 = vmatprep.subr.mxu0 0.0
          %313 = vmatpush1.msra.mxu0 0.0
          %314 = vmatprep.subr.mxu0 0.0
          %315 = vmatpush1.msra.mxu0 0.0
          %316 = vmatprep.subr.mxu0 0.0
          %317 = vmatpush1.msra.mxu0 0.0
          %318 = vmatprep.subr.mxu0 0.0
          %319 = vmatpush1.msra.mxu0 0.0
          %320 = vmatprep.subr.mxu0 0.0
          %321 = vmatpush1.msra.mxu0 0.0
          %322 = vmatprep.subr.mxu0 0.0
          %323 = vmatpush1.msra.mxu0 0.0
          %324 = vmatprep.subr.mxu0 0.0
          %325 = vmatpush1.msra.mxu0 0.0
          %326 = vmatprep.subr.mxu0 0.0
          %327 = vmatpush1.msra.mxu0 0.0
          %328 = vmatprep.subr.mxu0 0.0
          %329 = vmatpush1.msra.mxu0 0.0
          %330 = vmatprep.subr.mxu0 0.0
          %331 = vmatpush1.msra.mxu0 0.0
          %332 = vmatprep.subr.mxu0 0.0
          %333 = vmatpush1.msra.mxu0 0.0
          %334 = vmatprep.subr.mxu0 0.0
          %335 = vmatpush1.msra.mxu0 0.0
          %336 = vmatprep.subr.mxu0 0.0
          %337 = vmatpush1.msra.mxu0 0.0
          %338 = vmatprep.subr.mxu0 0.0
          %339 = vmatpush1.msra.mxu0 0.0
          %340 = vmatprep.subr.mxu0 0.0
          %341 = vmatpush1.msra.mxu0 0.0
          %342 = vmatprep.subr.mxu0 0.0
          %343 = vmatpush1.msra.mxu0 0.0
          %344 = vmatprep.subr.mxu0 0.0
          %345 = vmatpush1.msra.mxu0 0.0
          %346 = vmatprep.subr.mxu0 0.0
          %347 = vmatpush1.msra.mxu0 0.0
          %348 = vmatprep.mubr.f32.mxu0 0.0
          %349 = vmatmul.mubr.f32.gmra.mrb[0].mxu0 %v279
          %v350 = vpop.f32.mrb[0].mxu0
          %v351 = vadd.f32 0.0, %v350
          %v352 = vpop.f32.mrb[0].mxu0
          %353 = vmatprep.mubr.f32.mxu0 0.0
          %354 = vmatmul.mubr.f32.gmra.mrb[0].mxu0 %v282
          %v355 = vpop.f32.mrb[0].mxu0
          %v356 = vadd.f32 0.0, %v355
          %v357 = vpop.f32.mrb[0].mxu0
          %358 = vdwg.mxu0
          %v360 = vsel %vm203, %v269, 0
          %v363 = vsel %vm203, %v270, 0
          %365 = vmatprep.subr.mxu0 0.0
          %366 = vmatpush1.msra.mxu0 %v271
          %367 = vmatprep.subr.mxu0 0.0
          %368 = vmatpush1.msra.mxu0 %v272
          %369 = vmatprep.subr.mxu0 0.0
          %370 = vmatpush1.msra.mxu0 0.0
          %371 = vmatprep.subr.mxu0 0.0
          %372 = vmatpush1.msra.mxu0 0.0
          %373 = vmatprep.subr.mxu0 0.0
          %374 = vmatpush1.msra.mxu0 0.0
          %375 = vmatprep.subr.mxu0 0.0
          %376 = vmatpush1.msra.mxu0 0.0
          %377 = vmatprep.subr.mxu0 0.0
          %378 = vmatpush1.msra.mxu0 0.0
          %379 = vmatprep.subr.mxu0 0.0
          %380 = vmatpush1.msra.mxu0 0.0
          %381 = vmatprep.subr.mxu0 0.0
          %382 = vmatpush1.msra.mxu0 0.0
          %383 = vmatprep.subr.mxu0 0.0
          %384 = vmatpush1.msra.mxu0 0.0
          %385 = vmatprep.subr.mxu0 0.0
          %386 = vmatpush1.msra.mxu0 0.0
          %387 = vmatprep.subr.mxu0 0.0
          %388 = vmatpush1.msra.mxu0 0.0
          %389 = vmatprep.subr.mxu0 0.0
          %390 = vmatpush1.msra.mxu0 0.0
          %391 = vmatprep.subr.mxu0 0.0
          %392 = vmatpush1.msra.mxu0 0.0
          %393 = vmatprep.subr.mxu0 0.0
          %394 = vmatpush1.msra.mxu0 0.0
          %395 = vmatprep.subr.mxu0 0.0
          %396 = vmatpush1.msra.mxu0 0.0
          %397 = vmatprep.subr.mxu0 0.0
          %398 = vmatpush1.msra.mxu0 0.0
          %399 = vmatprep.subr.mxu0 0.0
          %400 = vmatpush1.msra.mxu0 0.0
          %401 = vmatprep.subr.mxu0 0.0
          %402 = vmatpush1.msra.mxu0 0.0
          %403 = vmatprep.subr.mxu0 0.0
          %404 = vmatpush1.msra.mxu0 0.0
          %405 = vmatprep.subr.mxu0 0.0
          %406 = vmatpush1.msra.mxu0 0.0
          %407 = vmatprep.subr.mxu0 0.0
          %408 = vmatpush1.msra.mxu0 0.0
          %409 = vmatprep.subr.mxu0 0.0
          %410 = vmatpush1.msra.mxu0 0.0
          %411 = vmatprep.subr.mxu0 0.0
          %412 = vmatpush1.msra.mxu0 0.0
          %413 = vmatprep.subr.mxu0 0.0
          %414 = vmatpush1.msra.mxu0 0.0
          %415 = vmatprep.subr.mxu0 0.0
          %416 = vmatpush1.msra.mxu0 0.0
          %417 = vmatprep.subr.mxu0 0.0
          %418 = vmatpush1.msra.mxu0 0.0
          %419 = vmatprep.subr.mxu0 0.0
          %420 = vmatpush1.msra.mxu0 0.0
          %421 = vmatprep.subr.mxu0 0.0
          %422 = vmatpush1.msra.mxu0 0.0
          %423 = vmatprep.subr.mxu0 0.0
          %424 = vmatpush1.msra.mxu0 0.0
          %425 = vmatprep.subr.mxu0 0.0
          %426 = vmatpush1.msra.mxu0 0.0
          %427 = vmatprep.subr.mxu0 0.0
          %428 = vmatpush1.msra.mxu0 0.0
          %429 = vmatprep.mubr.f32.mxu0 0.0
          %430 = vmatmul.mubr.f32.gmra.mrb[0].mxu0 %v360
          %v431 = vpop.f32.mrb[0].mxu0
          %v432 = vadd.f32 %v351, %v431
          %v433 = vpop.f32.mrb[0].mxu0
          %434 = vmatprep.mubr.f32.mxu0 0.0
          %435 = vmatmul.mubr.f32.gmra.mrb[0].mxu0 %v363
          %v436 = vpop.f32.mrb[0].mxu0
          %v437 = vadd.f32 %v356, %v436
          %v438 = vpop.f32.mrb[0].mxu0
          %439 = vdwg.mxu0
          %v440 = vld [vmem:[#allocation4 + $0x2] sm:$0xff]
          %v441 = vld [vmem:[#allocation4 + $0xa] sm:$0xff]
          %s442 = scalar_lea.vmem [#allocation8], 32
          %v443 = vld [vmem:[%s442] sm:$0xff]
          %v444 = vld [vmem:[%s442 + $0x8] sm:$0xff]
          %v446 = vsel %vm203, %v440, 0
          %v449 = vsel %vm203, %v441, 0
          %451 = vmatprep.subr.mxu0 0.0
          %452 = vmatpush1.msra.mxu0 %v443
          %453 = vmatprep.subr.mxu0 0.0
          %454 = vmatpush1.msra.mxu0 %v444
          %455 = vmatprep.subr.mxu0 0.0
          %456 = vmatpush1.msra.mxu0 0.0
          %457 = vmatprep.subr.mxu0 0.0
          %458 = vmatpush1.msra.mxu0 0.0
          %459 = vmatprep.subr.mxu0 0.0
          %460 = vmatpush1.msra.mxu0 0.0
          %461 = vmatprep.subr.mxu0 0.0
          %462 = vmatpush1.msra.mxu0 0.0
          %463 = vmatprep.subr.mxu0 0.0
          %464 = vmatpush1.msra.mxu0 0.0
          %465 = vmatprep.subr.mxu0 0.0
          %466 = vmatpush1.msra.mxu0 0.0
          %467 = vmatprep.subr.mxu0 0.0
          %468 = vmatpush1.msra.mxu0 0.0
          %469 = vmatprep.subr.mxu0 0.0
          %470 = vmatpush1.msra.mxu0 0.0
          %471 = vmatprep.subr.mxu0 0.0
          %472 = vmatpush1.msra.mxu0 0.0
          %473 = vmatprep.subr.mxu0 0.0
          %474 = vmatpush1.msra.mxu0 0.0
          %475 = vmatprep.subr.mxu0 0.0
          %476 = vmatpush1.msra.mxu0 0.0
          %477 = vmatprep.subr.mxu0 0.0
          %478 = vmatpush1.msra.mxu0 0.0
          %479 = vmatprep.subr.mxu0 0.0
          %480 = vmatpush1.msra.mxu0 0.0
          %481 = vmatprep.subr.mxu0 0.0
          %482 = vmatpush1.msra.mxu0 0.0
          %483 = vmatprep.subr.mxu0 0.0
          %484 = vmatpush1.msra.mxu0 0.0
          %485 = vmatprep.subr.mxu0 0.0
          %486 = vmatpush1.msra.mxu0 0.0
          %487 = vmatprep.subr.mxu0 0.0
          %488 = vmatpush1.msra.mxu0 0.0
          %489 = vmatprep.subr.mxu0 0.0
          %490 = vmatpush1.msra.mxu0 0.0
          %491 = vmatprep.subr.mxu0 0.0
          %492 = vmatpush1.msra.mxu0 0.0
          %493 = vmatprep.subr.mxu0 0.0
          %494 = vmatpush1.msra.mxu0 0.0
          %495 = vmatprep.subr.mxu0 0.0
          %496 = vmatpush1.msra.mxu0 0.0
          %497 = vmatprep.subr.mxu0 0.0
          %498 = vmatpush1.msra.mxu0 0.0
          %499 = vmatprep.subr.mxu0 0.0
          %500 = vmatpush1.msra.mxu0 0.0
          %501 = vmatprep.subr.mxu0 0.0
          %502 = vmatpush1.msra.mxu0 0.0
          %503 = vmatprep.subr.mxu0 0.0
          %504 = vmatpush1.msra.mxu0 0.0
          %505 = vmatprep.subr.mxu0 0.0
          %506 = vmatpush1.msra.mxu0 0.0
          %507 = vmatprep.subr.mxu0 0.0
          %508 = vmatpush1.msra.mxu0 0.0
          %509 = vmatprep.subr.mxu0 0.0
          %510 = vmatpush1.msra.mxu0 0.0
          %511 = vmatprep.subr.mxu0 0.0
          %512 = vmatpush1.msra.mxu0 0.0
          %513 = vmatprep.subr.mxu0 0.0
          %514 = vmatpush1.msra.mxu0 0.0
          %515 = vmatprep.mubr.f32.mxu0 0.0
          %516 = vmatmul.mubr.f32.gmra.mrb[0].mxu0 %v446
          %v517 = vpop.f32.mrb[0].mxu0
          %v518 = vadd.f32 0.0, %v517
          %v519 = vpop.f32.mrb[0].mxu0
          %520 = vmatprep.mubr.f32.mxu0 0.0
          %521 = vmatmul.mubr.f32.gmra.mrb[0].mxu0 %v449
          %v522 = vpop.f32.mrb[0].mxu0
          %v523 = vadd.f32 0.0, %v522
          %v524 = vpop.f32.mrb[0].mxu0
          %525 = vdwg.mxu0
          %v526 = vadd.f32 %v432, %v518
          %v527 = vadd.f32 %v437, %v523
          %v528 = vld [vmem:[#allocation4 + $0x3] sm:$0xff]
          %v529 = vld [vmem:[#allocation4 + $0xb] sm:$0xff]
          %s530 = scalar_lea.vmem [#allocation8], 48
          %v531 = vld [vmem:[%s530] sm:$0xff]
          %v532 = vld [vmem:[%s530 + $0x8] sm:$0xff]
          %v534 = vsel %vm203, %v528, 0
          %v537 = vsel %vm203, %v529, 0
          %539 = vmatprep.subr.mxu0 0.0
          %540 = vmatpush1.msra.mxu0 %v531
          %541 = vmatprep.subr.mxu0 0.0
          %542 = vmatpush1.msra.mxu0 %v532
          %543 = vmatprep.subr.mxu0 0.0
          %544 = vmatpush1.msra.mxu0 0.0
          %545 = vmatprep.subr.mxu0 0.0
          %546 = vmatpush1.msra.mxu0 0.0
          %547 = vmatprep.subr.mxu0 0.0
          %548 = vmatpush1.msra.mxu0 0.0
          %549 = vmatprep.subr.mxu0 0.0
          %550 = vmatpush1.msra.mxu0 0.0
          %551 = vmatprep.subr.mxu0 0.0
          %552 = vmatpush1.msra.mxu0 0.0
          %553 = vmatprep.subr.mxu0 0.0
          %554 = vmatpush1.msra.mxu0 0.0
          %555 = vmatprep.subr.mxu0 0.0
          %556 = vmatpush1.msra.mxu0 0.0
          %557 = vmatprep.subr.mxu0 0.0
          %558 = vmatpush1.msra.mxu0 0.0
          %559 = vmatprep.subr.mxu0 0.0
          %560 = vmatpush1.msra.mxu0 0.0
          %561 = vmatprep.subr.mxu0 0.0
          %562 = vmatpush1.msra.mxu0 0.0
          %563 = vmatprep.subr.mxu0 0.0
          %564 = vmatpush1.msra.mxu0 0.0
          %565 = vmatprep.subr.mxu0 0.0
          %566 = vmatpush1.msra.mxu0 0.0
          %567 = vmatprep.subr.mxu0 0.0
          %568 = vmatpush1.msra.mxu0 0.0
          %569 = vmatprep.subr.mxu0 0.0
          %570 = vmatpush1.msra.mxu0 0.0
          %571 = vmatprep.subr.mxu0 0.0
          %572 = vmatpush1.msra.mxu0 0.0
          %573 = vmatprep.subr.mxu0 0.0
          %574 = vmatpush1.msra.mxu0 0.0
          %575 = vmatprep.subr.mxu0 0.0
          %576 = vmatpush1.msra.mxu0 0.0
          %577 = vmatprep.subr.mxu0 0.0
          %578 = vmatpush1.msra.mxu0 0.0
          %579 = vmatprep.subr.mxu0 0.0
          %580 = vmatpush1.msra.mxu0 0.0
          %581 = vmatprep.subr.mxu0 0.0
          %582 = vmatpush1.msra.mxu0 0.0
          %583 = vmatprep.subr.mxu0 0.0
          %584 = vmatpush1.msra.mxu0 0.0
          %585 = vmatprep.subr.mxu0 0.0
          %586 = vmatpush1.msra.mxu0 0.0
          %587 = vmatprep.subr.mxu0 0.0
          %588 = vmatpush1.msra.mxu0 0.0
          %589 = vmatprep.subr.mxu0 0.0
          %590 = vmatpush1.msra.mxu0 0.0
          %591 = vmatprep.subr.mxu0 0.0
          %592 = vmatpush1.msra.mxu0 0.0
          %593 = vmatprep.subr.mxu0 0.0
          %594 = vmatpush1.msra.mxu0 0.0
          %595 = vmatprep.subr.mxu0 0.0
          %596 = vmatpush1.msra.mxu0 0.0
          %597 = vmatprep.subr.mxu0 0.0
          %598 = vmatpush1.msra.mxu0 0.0
          %599 = vmatprep.subr.mxu0 0.0
          %600 = vmatpush1.msra.mxu0 0.0
          %601 = vmatprep.subr.mxu0 0.0
          %602 = vmatpush1.msra.mxu0 0.0
          %603 = vmatprep.mubr.f32.mxu0 0.0
          %604 = vmatmul.mubr.f32.gmra.mrb[0].mxu0 %v534
          %v605 = vpop.f32.mrb[0].mxu0
          %v606 = vadd.f32 0.0, %v605
          %v607 = vpop.f32.mrb[0].mxu0
          %608 = vmatprep.mubr.f32.mxu0 0.0
          %609 = vmatmul.mubr.f32.gmra.mrb[0].mxu0 %v537
          %v610 = vpop.f32.mrb[0].mxu0
          %v611 = vadd.f32 0.0, %v610
          %v612 = vpop.f32.mrb[0].mxu0
          %613 = vdwg.mxu0
          %v614 = vadd.f32 %v526, %v606
          %v615 = vadd.f32 %v527, %v611
          %v616 = vld [vmem:[#allocation4 + $0x4] sm:$0xff]
          %v617 = vld [vmem:[#allocation4 + $0xc] sm:$0xff]
          %s618 = scalar_lea.vmem [#allocation8], 64
          %v619 = vld [vmem:[%s618] sm:$0xff]
          %v620 = vld [vmem:[%s618 + $0x8] sm:$0xff]
          %v622 = vsel %vm203, %v616, 0
          %v625 = vsel %vm203, %v617, 0
          %627 = vmatprep.subr.mxu0 0.0
          %628 = vmatpush1.msra.mxu0 %v619
          %629 = vmatprep.subr.mxu0 0.0
          %630 = vmatpush1.msra.mxu0 %v620
          %631 = vmatprep.subr.mxu0 0.0
          %632 = vmatpush1.msra.mxu0 0.0
          %633 = vmatprep.subr.mxu0 0.0
          %634 = vmatpush1.msra.mxu0 0.0
          %635 = vmatprep.subr.mxu0 0.0
          %636 = vmatpush1.msra.mxu0 0.0
          %637 = vmatprep.subr.mxu0 0.0
          %638 = vmatpush1.msra.mxu0 0.0
          %639 = vmatprep.subr.mxu0 0.0
          %640 = vmatpush1.msra.mxu0 0.0
          %641 = vmatprep.subr.mxu0 0.0
          %642 = vmatpush1.msra.mxu0 0.0
          %643 = vmatprep.subr.mxu0 0.0
          %644 = vmatpush1.msra.mxu0 0.0
          %645 = vmatprep.subr.mxu0 0.0
          %646 = vmatpush1.msra.mxu0 0.0
          %647 = vmatprep.subr.mxu0 0.0
          %648 = vmatpush1.msra.mxu0 0.0
          %649 = vmatprep.subr.mxu0 0.0
          %650 = vmatpush1.msra.mxu0 0.0
          %651 = vmatprep.subr.mxu0 0.0
          %652 = vmatpush1.msra.mxu0 0.0
          %653 = vmatprep.subr.mxu0 0.0
          %654 = vmatpush1.msra.mxu0 0.0
          %655 = vmatprep.subr.mxu0 0.0
          %656 = vmatpush1.msra.mxu0 0.0
          %657 = vmatprep.subr.mxu0 0.0
          %658 = vmatpush1.msra.mxu0 0.0
          %659 = vmatprep.subr.mxu0 0.0
          %660 = vmatpush1.msra.mxu0 0.0
          %661 = vmatprep.subr.mxu0 0.0
          %662 = vmatpush1.msra.mxu0 0.0
          %663 = vmatprep.subr.mxu0 0.0
          %664 = vmatpush1.msra.mxu0 0.0
          %665 = vmatprep.subr.mxu0 0.0
          %666 = vmatpush1.msra.mxu0 0.0
          %667 = vmatprep.subr.mxu0 0.0
          %668 = vmatpush1.msra.mxu0 0.0
          %669 = vmatprep.subr.mxu0 0.0
          %670 = vmatpush1.msra.mxu0 0.0
          %671 = vmatprep.subr.mxu0 0.0
          %672 = vmatpush1.msra.mxu0 0.0
          %673 = vmatprep.subr.mxu0 0.0
          %674 = vmatpush1.msra.mxu0 0.0
          %675 = vmatprep.subr.mxu0 0.0
          %676 = vmatpush1.msra.mxu0 0.0
          %677 = vmatprep.subr.mxu0 0.0
          %678 = vmatpush1.msra.mxu0 0.0
          %679 = vmatprep.subr.mxu0 0.0
          %680 = vmatpush1.msra.mxu0 0.0
          %681 = vmatprep.subr.mxu0 0.0
          %682 = vmatpush1.msra.mxu0 0.0
          %683 = vmatprep.subr.mxu0 0.0
          %684 = vmatpush1.msra.mxu0 0.0
          %685 = vmatprep.subr.mxu0 0.0
          %686 = vmatpush1.msra.mxu0 0.0
          %687 = vmatprep.subr.mxu0 0.0
          %688 = vmatpush1.msra.mxu0 0.0
          %689 = vmatprep.subr.mxu0 0.0
          %690 = vmatpush1.msra.mxu0 0.0
          %691 = vmatprep.mubr.f32.mxu0 0.0
          %692 = vmatmul.mubr.f32.gmra.mrb[0].mxu0 %v622
          %v693 = vpop.f32.mrb[0].mxu0
          %v694 = vadd.f32 0.0, %v693
          %v695 = vpop.f32.mrb[0].mxu0
          %696 = vmatprep.mubr.f32.mxu0 0.0
          %697 = vmatmul.mubr.f32.gmra.mrb[0].mxu0 %v625
          %v698 = vpop.f32.mrb[0].mxu0
          %v699 = vadd.f32 0.0, %v698
          %v700 = vpop.f32.mrb[0].mxu0
          %701 = vdwg.mxu0
          %v702 = vadd.f32 %v614, %v694
          %v703 = vadd.f32 %v615, %v699
          %v704 = vld [vmem:[#allocation4 + $0x5] sm:$0xff]
          %v705 = vld [vmem:[#allocation4 + $0xd] sm:$0xff]
          %s706 = scalar_lea.vmem [#allocation8], 80
          %v707 = vld [vmem:[%s706] sm:$0xff]
          %v708 = vld [vmem:[%s706 + $0x8] sm:$0xff]
          %v710 = vsel %vm203, %v704, 0
          %v713 = vsel %vm203, %v705, 0
          %715 = vmatprep.subr.mxu0 0.0
          %716 = vmatpush1.msra.mxu0 %v707
          %717 = vmatprep.subr.mxu0 0.0
          %718 = vmatpush1.msra.mxu0 %v708
          %719 = vmatprep.subr.mxu0 0.0
          %720 = vmatpush1.msra.mxu0 0.0
          %721 = vmatprep.subr.mxu0 0.0
          %722 = vmatpush1.msra.mxu0 0.0
          %723 = vmatprep.subr.mxu0 0.0
          %724 = vmatpush1.msra.mxu0 0.0
          %725 = vmatprep.subr.mxu0 0.0
          %726 = vmatpush1.msra.mxu0 0.0
          %727 = vmatprep.subr.mxu0 0.0
          %728 = vmatpush1.msra.mxu0 0.0
          %729 = vmatprep.subr.mxu0 0.0
          %730 = vmatpush1.msra.mxu0 0.0
          %731 = vmatprep.subr.mxu0 0.0
          %732 = vmatpush1.msra.mxu0 0.0
          %733 = vmatprep.subr.mxu0 0.0
          %734 = vmatpush1.msra.mxu0 0.0
          %735 = vmatprep.subr.mxu0 0.0
          %736 = vmatpush1.msra.mxu0 0.0
          %737 = vmatprep.subr.mxu0 0.0
          %738 = vmatpush1.msra.mxu0 0.0
          %739 = vmatprep.subr.mxu0 0.0
          %740 = vmatpush1.msra.mxu0 0.0
          %741 = vmatprep.subr.mxu0 0.0
          %742 = vmatpush1.msra.mxu0 0.0
          %743 = vmatprep.subr.mxu0 0.0
          %744 = vmatpush1.msra.mxu0 0.0
          %745 = vmatprep.subr.mxu0 0.0
          %746 = vmatpush1.msra.mxu0 0.0
          %747 = vmatprep.subr.mxu0 0.0
          %748 = vmatpush1.msra.mxu0 0.0
          %749 = vmatprep.subr.mxu0 0.0
          %750 = vmatpush1.msra.mxu0 0.0
          %751 = vmatprep.subr.mxu0 0.0
          %752 = vmatpush1.msra.mxu0 0.0
          %753 = vmatprep.subr.mxu0 0.0
          %754 = vmatpush1.msra.mxu0 0.0
          %755 = vmatprep.subr.mxu0 0.0
          %756 = vmatpush1.msra.mxu0 0.0
          %757 = vmatprep.subr.mxu0 0.0
          %758 = vmatpush1.msra.mxu0 0.0
          %759 = vmatprep.subr.mxu0 0.0
          %760 = vmatpush1.msra.mxu0 0.0
          %761 = vmatprep.subr.mxu0 0.0
          %762 = vmatpush1.msra.mxu0 0.0
          %763 = vmatprep.subr.mxu0 0.0
          %764 = vmatpush1.msra.mxu0 0.0
          %765 = vmatprep.subr.mxu0 0.0
          %766 = vmatpush1.msra.mxu0 0.0
          %767 = vmatprep.subr.mxu0 0.0
          %768 = vmatpush1.msra.mxu0 0.0
          %769 = vmatprep.subr.mxu0 0.0
          %770 = vmatpush1.msra.mxu0 0.0
          %771 = vmatprep.subr.mxu0 0.0
          %772 = vmatpush1.msra.mxu0 0.0
          %773 = vmatprep.subr.mxu0 0.0
          %774 = vmatpush1.msra.mxu0 0.0
          %775 = vmatprep.subr.mxu0 0.0
          %776 = vmatpush1.msra.mxu0 0.0
          %777 = vmatprep.subr.mxu0 0.0
          %778 = vmatpush1.msra.mxu0 0.0
          %779 = vmatprep.mubr.f32.mxu0 0.0
          %780 = vmatmul.mubr.f32.gmra.mrb[0].mxu0 %v710
          %v781 = vpop.f32.mrb[0].mxu0
          %v782 = vadd.f32 0.0, %v781
          %v783 = vpop.f32.mrb[0].mxu0
          %784 = vmatprep.mubr.f32.mxu0 0.0
          %785 = vmatmul.mubr.f32.gmra.mrb[0].mxu0 %v713
          %v786 = vpop.f32.mrb[0].mxu0
          %v787 = vadd.f32 0.0, %v786
          %v788 = vpop.f32.mrb[0].mxu0
          %789 = vdwg.mxu0
          %v790 = vadd.f32 %v702, %v782
          %v791 = vadd.f32 %v703, %v787
          %v792 = vld [vmem:[#allocation4 + $0x6] sm:$0xff]
          %v793 = vld [vmem:[#allocation4 + $0xe] sm:$0xff]
          %s794 = scalar_lea.vmem [#allocation8], 96
          %v795 = vld [vmem:[%s794] sm:$0xff]
          %v796 = vld [vmem:[%s794 + $0x8] sm:$0xff]
          %v798 = vsel %vm203, %v792, 0
          %v801 = vsel %vm203, %v793, 0
          %803 = vmatprep.subr.mxu0 0.0
          %804 = vmatpush1.msra.mxu0 %v795
          %805 = vmatprep.subr.mxu0 0.0
          %806 = vmatpush1.msra.mxu0 %v796
          %807 = vmatprep.subr.mxu0 0.0
          %808 = vmatpush1.msra.mxu0 0.0
          %809 = vmatprep.subr.mxu0 0.0
          %810 = vmatpush1.msra.mxu0 0.0
          %811 = vmatprep.subr.mxu0 0.0
          %812 = vmatpush1.msra.mxu0 0.0
          %813 = vmatprep.subr.mxu0 0.0
          %814 = vmatpush1.msra.mxu0 0.0
          %815 = vmatprep.subr.mxu0 0.0
          %816 = vmatpush1.msra.mxu0 0.0
          %817 = vmatprep.subr.mxu0 0.0
          %818 = vmatpush1.msra.mxu0 0.0
          %819 = vmatprep.subr.mxu0 0.0
          %820 = vmatpush1.msra.mxu0 0.0
          %821 = vmatprep.subr.mxu0 0.0
          %822 = vmatpush1.msra.mxu0 0.0
          %823 = vmatprep.subr.mxu0 0.0
          %824 = vmatpush1.msra.mxu0 0.0
          %825 = vmatprep.subr.mxu0 0.0
          %826 = vmatpush1.msra.mxu0 0.0
          %827 = vmatprep.subr.mxu0 0.0
          %828 = vmatpush1.msra.mxu0 0.0
          %829 = vmatprep.subr.mxu0 0.0
          %830 = vmatpush1.msra.mxu0 0.0
          %831 = vmatprep.subr.mxu0 0.0
          %832 = vmatpush1.msra.mxu0 0.0
          %833 = vmatprep.subr.mxu0 0.0
          %834 = vmatpush1.msra.mxu0 0.0
          %835 = vmatprep.subr.mxu0 0.0
          %836 = vmatpush1.msra.mxu0 0.0
          %837 = vmatprep.subr.mxu0 0.0
          %838 = vmatpush1.msra.mxu0 0.0
          %839 = vmatprep.subr.mxu0 0.0
          %840 = vmatpush1.msra.mxu0 0.0
          %841 = vmatprep.subr.mxu0 0.0
          %842 = vmatpush1.msra.mxu0 0.0
          %843 = vmatprep.subr.mxu0 0.0
          %844 = vmatpush1.msra.mxu0 0.0
          %845 = vmatprep.subr.mxu0 0.0
          %846 = vmatpush1.msra.mxu0 0.0
          %847 = vmatprep.subr.mxu0 0.0
          %848 = vmatpush1.msra.mxu0 0.0
          %849 = vmatprep.subr.mxu0 0.0
          %850 = vmatpush1.msra.mxu0 0.0
          %851 = vmatprep.subr.mxu0 0.0
          %852 = vmatpush1.msra.mxu0 0.0
          %853 = vmatprep.subr.mxu0 0.0
          %854 = vmatpush1.msra.mxu0 0.0
          %855 = vmatprep.subr.mxu0 0.0
          %856 = vmatpush1.msra.mxu0 0.0
          %857 = vmatprep.subr.mxu0 0.0
          %858 = vmatpush1.msra.mxu0 0.0
          %859 = vmatprep.subr.mxu0 0.0
          %860 = vmatpush1.msra.mxu0 0.0
          %861 = vmatprep.subr.mxu0 0.0
          %862 = vmatpush1.msra.mxu0 0.0
          %863 = vmatprep.subr.mxu0 0.0
          %864 = vmatpush1.msra.mxu0 0.0
          %865 = vmatprep.subr.mxu0 0.0
          %866 = vmatpush1.msra.mxu0 0.0
          %867 = vmatprep.mubr.f32.mxu0 0.0
          %868 = vmatmul.mubr.f32.gmra.mrb[0].mxu0 %v798
          %v869 = vpop.f32.mrb[0].mxu0
          %v870 = vadd.f32 0.0, %v869
          %v871 = vpop.f32.mrb[0].mxu0
          %872 = vmatprep.mubr.f32.mxu0 0.0
          %873 = vmatmul.mubr.f32.gmra.mrb[0].mxu0 %v801
          %v874 = vpop.f32.mrb[0].mxu0
          %v875 = vadd.f32 0.0, %v874
          %v876 = vpop.f32.mrb[0].mxu0
          %877 = vdwg.mxu0
          %v878 = vadd.f32 %v790, %v870
          %v879 = vadd.f32 %v791, %v875
          %v880 = vld [vmem:[%s258] sm:$0xff]
          %v881 = vld [vmem:[%s258 + $0x8] sm:$0xff]
          %s882 = scalar_lea.vmem [#allocation8], 112
          %v883 = vld [vmem:[%s882] sm:$0xff]
          %v884 = vld [vmem:[%s882 + $0x8] sm:$0xff]
          %v886 = vsel %vm203, %v880, 0
          %v889 = vsel %vm203, %v881, 0
          %891 = vmatprep.subr.mxu0 0.0
          %892 = vmatpush1.msra.mxu0 %v883
          %893 = vmatprep.subr.mxu0 0.0
          %894 = vmatpush1.msra.mxu0 %v884
          %895 = vmatprep.subr.mxu0 0.0
          %896 = vmatpush1.msra.mxu0 0.0
          %897 = vmatprep.subr.mxu0 0.0
          %898 = vmatpush1.msra.mxu0 0.0
          %899 = vmatprep.subr.mxu0 0.0
          %900 = vmatpush1.msra.mxu0 0.0
          %901 = vmatprep.subr.mxu0 0.0
          %902 = vmatpush1.msra.mxu0 0.0
          %903 = vmatprep.subr.mxu0 0.0
          %904 = vmatpush1.msra.mxu0 0.0
          %905 = vmatprep.subr.mxu0 0.0
          %906 = vmatpush1.msra.mxu0 0.0
          %907 = vmatprep.subr.mxu0 0.0
          %908 = vmatpush1.msra.mxu0 0.0
          %909 = vmatprep.subr.mxu0 0.0
          %910 = vmatpush1.msra.mxu0 0.0
          %911 = vmatprep.subr.mxu0 0.0
          %912 = vmatpush1.msra.mxu0 0.0
          %913 = vmatprep.subr.mxu0 0.0
          %914 = vmatpush1.msra.mxu0 0.0
          %915 = vmatprep.subr.mxu0 0.0
          %916 = vmatpush1.msra.mxu0 0.0
          %917 = vmatprep.subr.mxu0 0.0
          %918 = vmatpush1.msra.mxu0 0.0
          %919 = vmatprep.subr.mxu0 0.0
          %920 = vmatpush1.msra.mxu0 0.0
          %921 = vmatprep.subr.mxu0 0.0
          %922 = vmatpush1.msra.mxu0 0.0
          %923 = vmatprep.subr.mxu0 0.0
          %924 = vmatpush1.msra.mxu0 0.0
          %925 = vmatprep.subr.mxu0 0.0
          %926 = vmatpush1.msra.mxu0 0.0
          %927 = vmatprep.subr.mxu0 0.0
          %928 = vmatpush1.msra.mxu0 0.0
          %929 = vmatprep.subr.mxu0 0.0
          %930 = vmatpush1.msra.mxu0 0.0
          %931 = vmatprep.subr.mxu0 0.0
          %932 = vmatpush1.msra.mxu0 0.0
          %933 = vmatprep.subr.mxu0 0.0
          %934 = vmatpush1.msra.mxu0 0.0
          %935 = vmatprep.subr.mxu0 0.0
          %936 = vmatpush1.msra.mxu0 0.0
          %937 = vmatprep.subr.mxu0 0.0
          %938 = vmatpush1.msra.mxu0 0.0
          %939 = vmatprep.subr.mxu0 0.0
          %940 = vmatpush1.msra.mxu0 0.0
          %941 = vmatprep.subr.mxu0 0.0
          %942 = vmatpush1.msra.mxu0 0.0
          %943 = vmatprep.subr.mxu0 0.0
          %944 = vmatpush1.msra.mxu0 0.0
          %945 = vmatprep.subr.mxu0 0.0
          %946 = vmatpush1.msra.mxu0 0.0
          %947 = vmatprep.subr.mxu0 0.0
          %948 = vmatpush1.msra.mxu0 0.0
          %949 = vmatprep.subr.mxu0 0.0
          %950 = vmatpush1.msra.mxu0 0.0
          %951 = vmatprep.subr.mxu0 0.0
          %952 = vmatpush1.msra.mxu0 0.0
          %953 = vmatprep.subr.mxu0 0.0
          %954 = vmatpush1.msra.mxu0 0.0
          %955 = vmatprep.mubr.f32.mxu0 0.0
          %956 = vmatmul.mubr.f32.gmra.mrb[0].mxu0 %v886
          %v957 = vpop.f32.mrb[0].mxu0
          %v958 = vadd.f32 0.0, %v957
          %v959 = vpop.f32.mrb[0].mxu0
          %960 = vmatprep.mubr.f32.mxu0 0.0
          %961 = vmatmul.mubr.f32.gmra.mrb[0].mxu0 %v889
          %v962 = vpop.f32.mrb[0].mxu0
          %v963 = vadd.f32 0.0, %v962
          %v964 = vpop.f32.mrb[0].mxu0
          %965 = vdwg.mxu0
          %v966 = vadd.f32 %v878, %v958
          %v967 = vadd.f32 %v879, %v963
          %v968 = vld [vmem:[%s258 + $0x1] sm:$0xff]
          %v969 = vld [vmem:[%s258 + $0x9] sm:$0xff]
          %s970 = scalar_lea.vmem [#allocation8], 128
          %v971 = vld [vmem:[%s970] sm:$0xff]
          %v972 = vld [vmem:[%s970 + $0x8] sm:$0xff]
          %v974 = vsel %vm203, %v968, 0
          %v977 = vsel %vm203, %v969, 0
          %979 = vmatprep.subr.mxu0 0.0
          %980 = vmatpush1.msra.mxu0 %v971
          %981 = vmatprep.subr.mxu0 0.0
          %982 = vmatpush1.msra.mxu0 %v972
          %983 = vmatprep.subr.mxu0 0.0
          %984 = vmatpush1.msra.mxu0 0.0
          %985 = vmatprep.subr.mxu0 0.0
          %986 = vmatpush1.msra.mxu0 0.0
          %987 = vmatprep.subr.mxu0 0.0
          %988 = vmatpush1.msra.mxu0 0.0
          %989 = vmatprep.subr.mxu0 0.0
          %990 = vmatpush1.msra.mxu0 0.0
          %991 = vmatprep.subr.mxu0 0.0
          %992 = vmatpush1.msra.mxu0 0.0
          %993 = vmatprep.subr.mxu0 0.0
          %994 = vmatpush1.msra.mxu0 0.0
          %995 = vmatprep.subr.mxu0 0.0
          %996 = vmatpush1.msra.mxu0 0.0
          %997 = vmatprep.subr.mxu0 0.0
          %998 = vmatpush1.msra.mxu0 0.0
          %999 = vmatprep.subr.mxu0 0.0
          %1000 = vmatpush1.msra.mxu0 0.0
          %1001 = vmatprep.subr.mxu0 0.0
          %1002 = vmatpush1.msra.mxu0 0.0
          %1003 = vmatprep.subr.mxu0 0.0
          %1004 = vmatpush1.msra.mxu0 0.0
          %1005 = vmatprep.subr.mxu0 0.0
          %1006 = vmatpush1.msra.mxu0 0.0
          %1007 = vmatprep.subr.mxu0 0.0
          %1008 = vmatpush1.msra.mxu0 0.0
          %1009 = vmatprep.subr.mxu0 0.0
          %1010 = vmatpush1.msra.mxu0 0.0
          %1011 = vmatprep.subr.mxu0 0.0
          %1012 = vmatpush1.msra.mxu0 0.0
          %1013 = vmatprep.subr.mxu0 0.0
          %1014 = vmatpush1.msra.mxu0 0.0
          %1015 = vmatprep.subr.mxu0 0.0
          %1016 = vmatpush1.msra.mxu0 0.0
          %1017 = vmatprep.subr.mxu0 0.0
          %1018 = vmatpush1.msra.mxu0 0.0
          %1019 = vmatprep.subr.mxu0 0.0
          %1020 = vmatpush1.msra.mxu0 0.0
          %1021 = vmatprep.subr.mxu0 0.0
          %1022 = vmatpush1.msra.mxu0 0.0
          %1023 = vmatprep.subr.mxu0 0.0
          %1024 = vmatpush1.msra.mxu0 0.0
          %1025 = vmatprep.subr.mxu0 0.0
          %1026 = vmatpush1.msra.mxu0 0.0
          %1027 = vmatprep.subr.mxu0 0.0
          %1028 = vmatpush1.msra.mxu0 0.0
          %1029 = vmatprep.subr.mxu0 0.0
          %1030 = vmatpush1.msra.mxu0 0.0
          %1031 = vmatprep.subr.mxu0 0.0
          %1032 = vmatpush1.msra.mxu0 0.0
          %1033 = vmatprep.subr.mxu0 0.0
          %1034 = vmatpush1.msra.mxu0 0.0
          %1035 = vmatprep.subr.mxu0 0.0
          %1036 = vmatpush1.msra.mxu0 0.0
          %1037 = vmatprep.subr.mxu0 0.0
          %1038 = vmatpush1.msra.mxu0 0.0
          %1039 = vmatprep.subr.mxu0 0.0
          %1040 = vmatpush1.msra.mxu0 0.0
          %1041 = vmatprep.subr.mxu0 0.0
          %1042 = vmatpush1.msra.mxu0 0.0
          %1043 = vmatprep.mubr.f32.mxu0 0.0
          %1044 = vmatmul.mubr.f32.gmra.mrb[0].mxu0 %v974
          %v1045 = vpop.f32.mrb[0].mxu0
          %v1046 = vadd.f32 0.0, %v1045
          %v1047 = vpop.f32.mrb[0].mxu0
          %1048 = vmatprep.mubr.f32.mxu0 0.0
          %1049 = vmatmul.mubr.f32.gmra.mrb[0].mxu0 %v977
          %v1050 = vpop.f32.mrb[0].mxu0
          %v1051 = vadd.f32 0.0, %v1050
          %v1052 = vpop.f32.mrb[0].mxu0
          %1053 = vdwg.mxu0
          %v1054 = vadd.f32 %v966, %v1046
          %v1055 = vadd.f32 %v967, %v1051
          %v1056 = vld [vmem:[%s258 + $0x2] sm:$0xff]
          %v1057 = vld [vmem:[%s258 + $0xa] sm:$0xff]
          %s1058 = scalar_lea.vmem [#allocation8], 144
          %v1059 = vld [vmem:[%s1058] sm:$0xff]
          %v1060 = vld [vmem:[%s1058 + $0x8] sm:$0xff]
          %v1062 = vsel %vm203, %v1056, 0
          %v1065 = vsel %vm203, %v1057, 0
          %1067 = vmatprep.subr.mxu0 0.0
          %1068 = vmatpush1.msra.mxu0 %v1059
          %1069 = vmatprep.subr.mxu0 0.0
          %1070 = vmatpush1.msra.mxu0 %v1060
          %1071 = vmatprep.subr.mxu0 0.0
          %1072 = vmatpush1.msra.mxu0 0.0
          %1073 = vmatprep.subr.mxu0 0.0
          %1074 = vmatpush1.msra.mxu0 0.0
          %1075 = vmatprep.subr.mxu0 0.0
          %1076 = vmatpush1.msra.mxu0 0.0
          %1077 = vmatprep.subr.mxu0 0.0
          %1078 = vmatpush1.msra.mxu0 0.0
          %1079 = vmatprep.subr.mxu0 0.0
          %1080 = vmatpush1.msra.mxu0 0.0
          %1081 = vmatprep.subr.mxu0 0.0
          %1082 = vmatpush1.msra.mxu0 0.0
          %1083 = vmatprep.subr.mxu0 0.0
          %1084 = vmatpush1.msra.mxu0 0.0
          %1085 = vmatprep.subr.mxu0 0.0
          %1086 = vmatpush1.msra.mxu0 0.0
          %1087 = vmatprep.subr.mxu0 0.0
          %1088 = vmatpush1.msra.mxu0 0.0
          %1089 = vmatprep.subr.mxu0 0.0
          %1090 = vmatpush1.msra.mxu0 0.0
          %1091 = vmatprep.subr.mxu0 0.0
          %1092 = vmatpush1.msra.mxu0 0.0
          %1093 = vmatprep.subr.mxu0 0.0
          %1094 = vmatpush1.msra.mxu0 0.0
          %1095 = vmatprep.subr.mxu0 0.0
          %1096 = vmatpush1.msra.mxu0 0.0
          %1097 = vmatprep.subr.mxu0 0.0
          %1098 = vmatpush1.msra.mxu0 0.0
          %1099 = vmatprep.subr.mxu0 0.0
          %1100 = vmatpush1.msra.mxu0 0.0
          %1101 = vmatprep.subr.mxu0 0.0
          %1102 = vmatpush1.msra.mxu0 0.0
          %1103 = vmatprep.subr.mxu0 0.0
          %1104 = vmatpush1.msra.mxu0 0.0
          %1105 = vmatprep.subr.mxu0 0.0
          %1106 = vmatpush1.msra.mxu0 0.0
          %1107 = vmatprep.subr.mxu0 0.0
          %1108 = vmatpush1.msra.mxu0 0.0
          %1109 = vmatprep.subr.mxu0 0.0
          %1110 = vmatpush1.msra.mxu0 0.0
          %1111 = vmatprep.subr.mxu0 0.0
          %1112 = vmatpush1.msra.mxu0 0.0
          %1113 = vmatprep.subr.mxu0 0.0
          %1114 = vmatpush1.msra.mxu0 0.0
          %1115 = vmatprep.subr.mxu0 0.0
          %1116 = vmatpush1.msra.mxu0 0.0
          %1117 = vmatprep.subr.mxu0 0.0
          %1118 = vmatpush1.msra.mxu0 0.0
          %1119 = vmatprep.subr.mxu0 0.0
          %1120 = vmatpush1.msra.mxu0 0.0
          %1121 = vmatprep.subr.mxu0 0.0
          %1122 = vmatpush1.msra.mxu0 0.0
          %1123 = vmatprep.subr.mxu0 0.0
          %1124 = vmatpush1.msra.mxu0 0.0
          %1125 = vmatprep.subr.mxu0 0.0
          %1126 = vmatpush1.msra.mxu0 0.0
          %1127 = vmatprep.subr.mxu0 0.0
          %1128 = vmatpush1.msra.mxu0 0.0
          %1129 = vmatprep.subr.mxu0 0.0
          %1130 = vmatpush1.msra.mxu0 0.0
          %1131 = vmatprep.mubr.f32.mxu0 0.0
          %1132 = vmatmul.mubr.f32.gmra.mrb[0].mxu0 %v1062
          %v1133 = vpop.f32.mrb[0].mxu0
          %v1134 = vadd.f32 0.0, %v1133
          %v1135 = vpop.f32.mrb[0].mxu0
          %1136 = vmatprep.mubr.f32.mxu0 0.0
          %1137 = vmatmul.mubr.f32.gmra.mrb[0].mxu0 %v1065
          %v1138 = vpop.f32.mrb[0].mxu0
          %v1139 = vadd.f32 0.0, %v1138
          %v1140 = vpop.f32.mrb[0].mxu0
          %1141 = vdwg.mxu0
          %v1142 = vadd.f32 %v1054, %v1134
          %v1143 = vadd.f32 %v1055, %v1139
          %v1144 = vld [vmem:[%s258 + $0x3] sm:$0xff]
          %v1145 = vld [vmem:[%s258 + $0xb] sm:$0xff]
          %s1146 = scalar_lea.vmem [#allocation8], 160
          %v1147 = vld [vmem:[%s1146] sm:$0xff]
          %v1148 = vld [vmem:[%s1146 + $0x8] sm:$0xff]
          %v1150 = vsel %vm203, %v1144, 0
          %v1153 = vsel %vm203, %v1145, 0
          %1155 = vmatprep.subr.mxu0 0.0
          %1156 = vmatpush1.msra.mxu0 %v1147
          %1157 = vmatprep.subr.mxu0 0.0
          %1158 = vmatpush1.msra.mxu0 %v1148
          %1159 = vmatprep.subr.mxu0 0.0
          %1160 = vmatpush1.msra.mxu0 0.0
          %1161 = vmatprep.subr.mxu0 0.0
          %1162 = vmatpush1.msra.mxu0 0.0
          %1163 = vmatprep.subr.mxu0 0.0
          %1164 = vmatpush1.msra.mxu0 0.0
          %1165 = vmatprep.subr.mxu0 0.0
          %1166 = vmatpush1.msra.mxu0 0.0
          %1167 = vmatprep.subr.mxu0 0.0
          %1168 = vmatpush1.msra.mxu0 0.0
          %1169 = vmatprep.subr.mxu0 0.0
          %1170 = vmatpush1.msra.mxu0 0.0
          %1171 = vmatprep.subr.mxu0 0.0
          %1172 = vmatpush1.msra.mxu0 0.0
          %1173 = vmatprep.subr.mxu0 0.0
          %1174 = vmatpush1.msra.mxu0 0.0
          %1175 = vmatprep.subr.mxu0 0.0
          %1176 = vmatpush1.msra.mxu0 0.0
          %1177 = vmatprep.subr.mxu0 0.0
          %1178 = vmatpush1.msra.mxu0 0.0
          %1179 = vmatprep.subr.mxu0 0.0
          %1180 = vmatpush1.msra.mxu0 0.0
          %1181 = vmatprep.subr.mxu0 0.0
          %1182 = vmatpush1.msra.mxu0 0.0
          %1183 = vmatprep.subr.mxu0 0.0
          %1184 = vmatpush1.msra.mxu0 0.0
          %1185 = vmatprep.subr.mxu0 0.0
          %1186 = vmatpush1.msra.mxu0 0.0
          %1187 = vmatprep.subr.mxu0 0.0
          %1188 = vmatpush1.msra.mxu0 0.0
          %1189 = vmatprep.subr.mxu0 0.0
          %1190 = vmatpush1.msra.mxu0 0.0
          %1191 = vmatprep.subr.mxu0 0.0
          %1192 = vmatpush1.msra.mxu0 0.0
          %1193 = vmatprep.subr.mxu0 0.0
          %1194 = vmatpush1.msra.mxu0 0.0
          %1195 = vmatprep.subr.mxu0 0.0
          %1196 = vmatpush1.msra.mxu0 0.0
          %1197 = vmatprep.subr.mxu0 0.0
          %1198 = vmatpush1.msra.mxu0 0.0
          %1199 = vmatprep.subr.mxu0 0.0
          %1200 = vmatpush1.msra.mxu0 0.0
          %1201 = vmatprep.subr.mxu0 0.0
          %1202 = vmatpush1.msra.mxu0 0.0
          %1203 = vmatprep.subr.mxu0 0.0
          %1204 = vmatpush1.msra.mxu0 0.0
          %1205 = vmatprep.subr.mxu0 0.0
          %1206 = vmatpush1.msra.mxu0 0.0
          %1207 = vmatprep.subr.mxu0 0.0
          %1208 = vmatpush1.msra.mxu0 0.0
          %1209 = vmatprep.subr.mxu0 0.0
          %1210 = vmatpush1.msra.mxu0 0.0
          %1211 = vmatprep.subr.mxu0 0.0
          %1212 = vmatpush1.msra.mxu0 0.0
          %1213 = vmatprep.subr.mxu0 0.0
          %1214 = vmatpush1.msra.mxu0 0.0
          %1215 = vmatprep.subr.mxu0 0.0
          %1216 = vmatpush1.msra.mxu0 0.0
          %1217 = vmatprep.subr.mxu0 0.0
          %1218 = vmatpush1.msra.mxu0 0.0
          %1219 = vmatprep.mubr.f32.mxu0 0.0
          %1220 = vmatmul.mubr.f32.gmra.mrb[0].mxu0 %v1150
          %v1221 = vpop.f32.mrb[0].mxu0
          %v1222 = vadd.f32 0.0, %v1221
          %v1223 = vpop.f32.mrb[0].mxu0
          %1224 = vmatprep.mubr.f32.mxu0 0.0
          %1225 = vmatmul.mubr.f32.gmra.mrb[0].mxu0 %v1153
          %v1226 = vpop.f32.mrb[0].mxu0
          %v1227 = vadd.f32 0.0, %v1226
          %v1228 = vpop.f32.mrb[0].mxu0
          %1229 = vdwg.mxu0
          %v1230 = vadd.f32 %v1142, %v1222
          %v1231 = vadd.f32 %v1143, %v1227
          %v1232 = vld [vmem:[%s258 + $0x4] sm:$0xff]
          %v1233 = vld [vmem:[%s258 + $0xc] sm:$0xff]
          %s1234 = scalar_lea.vmem [#allocation8], 176
          %v1235 = vld [vmem:[%s1234] sm:$0xff]
          %v1236 = vld [vmem:[%s1234 + $0x8] sm:$0xff]
          %v1238 = vsel %vm203, %v1232, 0
          %v1241 = vsel %vm203, %v1233, 0
          %1243 = vmatprep.subr.mxu0 0.0
          %1244 = vmatpush1.msra.mxu0 %v1235
          %1245 = vmatprep.subr.mxu0 0.0
          %1246 = vmatpush1.msra.mxu0 %v1236
          %1247 = vmatprep.subr.mxu0 0.0
          %1248 = vmatpush1.msra.mxu0 0.0
          %1249 = vmatprep.subr.mxu0 0.0
          %1250 = vmatpush1.msra.mxu0 0.0
          %1251 = vmatprep.subr.mxu0 0.0
          %1252 = vmatpush1.msra.mxu0 0.0
          %1253 = vmatprep.subr.mxu0 0.0
          %1254 = vmatpush1.msra.mxu0 0.0
          %1255 = vmatprep.subr.mxu0 0.0
          %1256 = vmatpush1.msra.mxu0 0.0
          %1257 = vmatprep.subr.mxu0 0.0
          %1258 = vmatpush1.msra.mxu0 0.0
          %1259 = vmatprep.subr.mxu0 0.0
          %1260 = vmatpush1.msra.mxu0 0.0
          %1261 = vmatprep.subr.mxu0 0.0
          %1262 = vmatpush1.msra.mxu0 0.0
          %1263 = vmatprep.subr.mxu0 0.0
          %1264 = vmatpush1.msra.mxu0 0.0
          %1265 = vmatprep.subr.mxu0 0.0
          %1266 = vmatpush1.msra.mxu0 0.0
          %1267 = vmatprep.subr.mxu0 0.0
          %1268 = vmatpush1.msra.mxu0 0.0
          %1269 = vmatprep.subr.mxu0 0.0
          %1270 = vmatpush1.msra.mxu0 0.0
          %1271 = vmatprep.subr.mxu0 0.0
          %1272 = vmatpush1.msra.mxu0 0.0
          %1273 = vmatprep.subr.mxu0 0.0
          %1274 = vmatpush1.msra.mxu0 0.0
          %1275 = vmatprep.subr.mxu0 0.0
          %1276 = vmatpush1.msra.mxu0 0.0
          %1277 = vmatprep.subr.mxu0 0.0
          %1278 = vmatpush1.msra.mxu0 0.0
          %1279 = vmatprep.subr.mxu0 0.0
          %1280 = vmatpush1.msra.mxu0 0.0
          %1281 = vmatprep.subr.mxu0 0.0
          %1282 = vmatpush1.msra.mxu0 0.0
          %1283 = vmatprep.subr.mxu0 0.0
          %1284 = vmatpush1.msra.mxu0 0.0
          %1285 = vmatprep.subr.mxu0 0.0
          %1286 = vmatpush1.msra.mxu0 0.0
          %1287 = vmatprep.subr.mxu0 0.0
          %1288 = vmatpush1.msra.mxu0 0.0
          %1289 = vmatprep.subr.mxu0 0.0
          %1290 = vmatpush1.msra.mxu0 0.0
          %1291 = vmatprep.subr.mxu0 0.0
          %1292 = vmatpush1.msra.mxu0 0.0
          %1293 = vmatprep.subr.mxu0 0.0
          %1294 = vmatpush1.msra.mxu0 0.0
          %1295 = vmatprep.subr.mxu0 0.0
          %1296 = vmatpush1.msra.mxu0 0.0
          %1297 = vmatprep.subr.mxu0 0.0
          %1298 = vmatpush1.msra.mxu0 0.0
          %1299 = vmatprep.subr.mxu0 0.0
          %1300 = vmatpush1.msra.mxu0 0.0
          %1301 = vmatprep.subr.mxu0 0.0
          %1302 = vmatpush1.msra.mxu0 0.0
          %1303 = vmatprep.subr.mxu0 0.0
          %1304 = vmatpush1.msra.mxu0 0.0
          %1305 = vmatprep.subr.mxu0 0.0
          %1306 = vmatpush1.msra.mxu0 0.0
          %1307 = vmatprep.mubr.f32.mxu0 0.0
          %1308 = vmatmul.mubr.f32.gmra.mrb[0].mxu0 %v1238
          %v1309 = vpop.f32.mrb[0].mxu0
          %v1310 = vadd.f32 0.0, %v1309
          %v1311 = vpop.f32.mrb[0].mxu0
          %1312 = vmatprep.mubr.f32.mxu0 0.0
          %1313 = vmatmul.mubr.f32.gmra.mrb[0].mxu0 %v1241
          %v1314 = vpop.f32.mrb[0].mxu0
          %v1315 = vadd.f32 0.0, %v1314
          %v1316 = vpop.f32.mrb[0].mxu0
          %1317 = vdwg.mxu0
          %v1318 = vadd.f32 %v1230, %v1310
          %v1319 = vadd.f32 %v1231, %v1315
          %v1320 = vld [vmem:[%s258 + $0x5] sm:$0xff]
          %v1321 = vld [vmem:[%s258 + $0xd] sm:$0xff]
          %s1322 = scalar_lea.vmem [#allocation8], 192
          %v1323 = vld [vmem:[%s1322] sm:$0xff]
          %v1324 = vld [vmem:[%s1322 + $0x8] sm:$0xff]
          %v1326 = vsel %vm203, %v1320, 0
          %v1329 = vsel %vm203, %v1321, 0
          %1331 = vmatprep.subr.mxu0 0.0
          %1332 = vmatpush1.msra.mxu0 %v1323
          %1333 = vmatprep.subr.mxu0 0.0
          %1334 = vmatpush1.msra.mxu0 %v1324
          %1335 = vmatprep.subr.mxu0 0.0
          %1336 = vmatpush1.msra.mxu0 0.0
          %1337 = vmatprep.subr.mxu0 0.0
          %1338 = vmatpush1.msra.mxu0 0.0
          %1339 = vmatprep.subr.mxu0 0.0
          %1340 = vmatpush1.msra.mxu0 0.0
          %1341 = vmatprep.subr.mxu0 0.0
          %1342 = vmatpush1.msra.mxu0 0.0
          %1343 = vmatprep.subr.mxu0 0.0
          %1344 = vmatpush1.msra.mxu0 0.0
          %1345 = vmatprep.subr.mxu0 0.0
          %1346 = vmatpush1.msra.mxu0 0.0
          %1347 = vmatprep.subr.mxu0 0.0
          %1348 = vmatpush1.msra.mxu0 0.0
          %1349 = vmatprep.subr.mxu0 0.0
          %1350 = vmatpush1.msra.mxu0 0.0
          %1351 = vmatprep.subr.mxu0 0.0
          %1352 = vmatpush1.msra.mxu0 0.0
          %1353 = vmatprep.subr.mxu0 0.0
          %1354 = vmatpush1.msra.mxu0 0.0
          %1355 = vmatprep.subr.mxu0 0.0
          %1356 = vmatpush1.msra.mxu0 0.0
          %1357 = vmatprep.subr.mxu0 0.0
          %1358 = vmatpush1.msra.mxu0 0.0
          %1359 = vmatprep.subr.mxu0 0.0
          %1360 = vmatpush1.msra.mxu0 0.0
          %1361 = vmatprep.subr.mxu0 0.0
          %1362 = vmatpush1.msra.mxu0 0.0
          %1363 = vmatprep.subr.mxu0 0.0
          %1364 = vmatpush1.msra.mxu0 0.0
          %1365 = vmatprep.subr.mxu0 0.0
          %1366 = vmatpush1.msra.mxu0 0.0
          %1367 = vmatprep.subr.mxu0 0.0
          %1368 = vmatpush1.msra.mxu0 0.0
          %1369 = vmatprep.subr.mxu0 0.0
          %1370 = vmatpush1.msra.mxu0 0.0
          %1371 = vmatprep.subr.mxu0 0.0
          %1372 = vmatpush1.msra.mxu0 0.0
          %1373 = vmatprep.subr.mxu0 0.0
          %1374 = vmatpush1.msra.mxu0 0.0
          %1375 = vmatprep.subr.mxu0 0.0
          %1376 = vmatpush1.msra.mxu0 0.0
          %1377 = vmatprep.subr.mxu0 0.0
          %1378 = vmatpush1.msra.mxu0 0.0
          %1379 = vmatprep.subr.mxu0 0.0
          %1380 = vmatpush1.msra.mxu0 0.0
          %1381 = vmatprep.subr.mxu0 0.0
          %1382 = vmatpush1.msra.mxu0 0.0
          %1383 = vmatprep.subr.mxu0 0.0
          %1384 = vmatpush1.msra.mxu0 0.0
          %1385 = vmatprep.subr.mxu0 0.0
          %1386 = vmatpush1.msra.mxu0 0.0
          %1387 = vmatprep.subr.mxu0 0.0
          %1388 = vmatpush1.msra.mxu0 0.0
          %1389 = vmatprep.subr.mxu0 0.0
          %1390 = vmatpush1.msra.mxu0 0.0
          %1391 = vmatprep.subr.mxu0 0.0
          %1392 = vmatpush1.msra.mxu0 0.0
          %1393 = vmatprep.subr.mxu0 0.0
          %1394 = vmatpush1.msra.mxu0 0.0
          %1395 = vmatprep.mubr.f32.mxu0 0.0
          %1396 = vmatmul.mubr.f32.gmra.mrb[0].mxu0 %v1326
          %v1397 = vpop.f32.mrb[0].mxu0
          %v1398 = vadd.f32 0.0, %v1397
          %v1399 = vpop.f32.mrb[0].mxu0
          %1400 = vmatprep.mubr.f32.mxu0 0.0
          %1401 = vmatmul.mubr.f32.gmra.mrb[0].mxu0 %v1329
          %v1402 = vpop.f32.mrb[0].mxu0
          %v1403 = vadd.f32 0.0, %v1402
          %v1404 = vpop.f32.mrb[0].mxu0
          %1405 = vdwg.mxu0
          %v1406 = vadd.f32 %v1318, %v1398
          %v1407 = vadd.f32 %v1319, %v1403
          %v1408 = vld [vmem:[%s258 + $0x6] sm:$0xff]
          %v1409 = vld [vmem:[%s258 + $0xe] sm:$0xff]
          %s1410 = scalar_lea.vmem [#allocation8], 208
          %v1411 = vld [vmem:[%s1410] sm:$0xff]
          %v1412 = vld [vmem:[%s1410 + $0x8] sm:$0xff]
          %v1414 = vsel %vm203, %v1408, 0
          %v1417 = vsel %vm203, %v1409, 0
          %1419 = vmatprep.subr.mxu0 0.0
          %1420 = vmatpush1.msra.mxu0 %v1411
          %1421 = vmatprep.subr.mxu0 0.0
          %1422 = vmatpush1.msra.mxu0 %v1412
          %1423 = vmatprep.subr.mxu0 0.0
          %1424 = vmatpush1.msra.mxu0 0.0
          %1425 = vmatprep.subr.mxu0 0.0
          %1426 = vmatpush1.msra.mxu0 0.0
          %1427 = vmatprep.subr.mxu0 0.0
          %1428 = vmatpush1.msra.mxu0 0.0
          %1429 = vmatprep.subr.mxu0 0.0
          %1430 = vmatpush1.msra.mxu0 0.0
          %1431 = vmatprep.subr.mxu0 0.0
          %1432 = vmatpush1.msra.mxu0 0.0
          %1433 = vmatprep.subr.mxu0 0.0
          %1434 = vmatpush1.msra.mxu0 0.0
          %1435 = vmatprep.subr.mxu0 0.0
          %1436 = vmatpush1.msra.mxu0 0.0
          %1437 = vmatprep.subr.mxu0 0.0
          %1438 = vmatpush1.msra.mxu0 0.0
          %1439 = vmatprep.subr.mxu0 0.0
          %1440 = vmatpush1.msra.mxu0 0.0
          %1441 = vmatprep.subr.mxu0 0.0
          %1442 = vmatpush1.msra.mxu0 0.0
          %1443 = vmatprep.subr.mxu0 0.0
          %1444 = vmatpush1.msra.mxu0 0.0
          %1445 = vmatprep.subr.mxu0 0.0
          %1446 = vmatpush1.msra.mxu0 0.0
          %1447 = vmatprep.subr.mxu0 0.0
          %1448 = vmatpush1.msra.mxu0 0.0
          %1449 = vmatprep.subr.mxu0 0.0
          %1450 = vmatpush1.msra.mxu0 0.0
          %1451 = vmatprep.subr.mxu0 0.0
          %1452 = vmatpush1.msra.mxu0 0.0
          %1453 = vmatprep.subr.mxu0 0.0
          %1454 = vmatpush1.msra.mxu0 0.0
          %1455 = vmatprep.subr.mxu0 0.0
          %1456 = vmatpush1.msra.mxu0 0.0
          %1457 = vmatprep.subr.mxu0 0.0
          %1458 = vmatpush1.msra.mxu0 0.0
          %1459 = vmatprep.subr.mxu0 0.0
          %1460 = vmatpush1.msra.mxu0 0.0
          %1461 = vmatprep.subr.mxu0 0.0
          %1462 = vmatpush1.msra.mxu0 0.0
          %1463 = vmatprep.subr.mxu0 0.0
          %1464 = vmatpush1.msra.mxu0 0.0
          %1465 = vmatprep.subr.mxu0 0.0
          %1466 = vmatpush1.msra.mxu0 0.0
          %1467 = vmatprep.subr.mxu0 0.0
          %1468 = vmatpush1.msra.mxu0 0.0
          %1469 = vmatprep.subr.mxu0 0.0
          %1470 = vmatpush1.msra.mxu0 0.0
          %1471 = vmatprep.subr.mxu0 0.0
          %1472 = vmatpush1.msra.mxu0 0.0
          %1473 = vmatprep.subr.mxu0 0.0
          %1474 = vmatpush1.msra.mxu0 0.0
          %1475 = vmatprep.subr.mxu0 0.0
          %1476 = vmatpush1.msra.mxu0 0.0
          %1477 = vmatprep.subr.mxu0 0.0
          %1478 = vmatpush1.msra.mxu0 0.0
          %1479 = vmatprep.subr.mxu0 0.0
          %1480 = vmatpush1.msra.mxu0 0.0
          %1481 = vmatprep.subr.mxu0 0.0
          %1482 = vmatpush1.msra.mxu0 0.0
          %1483 = vmatprep.mubr.f32.mxu0 0.0
          %1484 = vmatmul.mubr.f32.gmra.mrb[0].mxu0 %v1414
          %v1485 = vpop.f32.mrb[0].mxu0
          %v1486 = vadd.f32 0.0, %v1485
          %v1487 = vpop.f32.mrb[0].mxu0
          %1488 = vmatprep.mubr.f32.mxu0 0.0
          %1489 = vmatmul.mubr.f32.gmra.mrb[0].mxu0 %v1417
          %v1490 = vpop.f32.mrb[0].mxu0
          %v1491 = vadd.f32 0.0, %v1490
          %v1492 = vpop.f32.mrb[0].mxu0
          %1493 = vdwg.mxu0
          %v1494 = vadd.f32 %v1406, %v1486
          %v1495 = vadd.f32 %v1407, %v1491
          %v1496 = vxor.u32 %v1494, 2147483648
          %v1497 = vxor.u32 %v1495, 2147483648
          %v1498 = vmul.f32 %v1496, 1.442695
          %v1499 = vpow.pop %v1498
          %v1500 = vmul.f32 %v1497, 1.442695
          %v1501 = vpow.pop %v1500
          %v1502 = vadd.f32 %v1499, 1.0
          %v1503 = vadd.f32 %v1501, 1.0
          %v1504 = vrcp.pop %v1502
          %v1505 = vmul.f32 1.0, %v1504
          %v1506 = vrcp.pop %v1503
          %v1507 = vmul.f32 1.0, %v1506
          %1508 = vst.msk [vmem:[%s193] sm:$0xff] %vm203, %v1505
          %1509 = vst.msk [vmem:[%s193 + $0x8] sm:$0xff] %vm203, %v1507
        $region44: #{tpu_custom_call.1} parent=27 // pred_fallthru
          _
        %s1510 = sand.u32 %s89, 1
        %s1511 = scalar_lea.sflag [#allocation7], %s1510
        %s1512 = sand.u32 %s89, 1
        %s1513 = smul.addr %s1512, 16
        %s1514 = scalar_lea.vmem [#allocation10], %s1513
        // Predicated region
        $region45: #{tpu_custom_call.1} parent=27 // pred_check
          %p1515 = pneg %p99
        $region46: #{tpu_custom_call.1} parent=27 // pred_check_branch
          %1517 = sbr.rel (%p1515) target = $region48
        $region47: #{tpu_custom_call.1} parent=27 // pred_region
          %s1519 = ssub.s32 256, 256
          %1520 = vsyncadd %s1511, %s1519
          %s1521 = smul.addr %s24, 2
          %s1522 = smul.addr %s1521, 128
          %s1523 = scalar_lea.hbm %s2, %s1522
          %s1524 = sshll.u32 %s1514, 4
          %s1525 = int_to_ptr.vmem [resolvable:$true] %s1524
          %1530 = dma.vmem_to_hbm [thread:$0]  %s1525, 256, %s1523, %s1511, 128, 128, 8
        $region48: #{tpu_custom_call.1} parent=27 // pred_fallthru
          _
      $region28: #{tpu_custom_call.1} parent=5 // pred_fallthru
        _
      %p1531 = scmp.le.s32.totalorder 2, %s15
      // Predicated region
      $region49: #{tpu_custom_call.1} parent=5 // pred_check
        %p1532 = pneg %p1531
      $region50: #{tpu_custom_call.1} parent=5 // pred_check_branch
        %1534 = sbr.rel (%p1532) target = $region52
      $region51: #{tpu_custom_call.1} parent=5 // pred_region
        %s1535 = ssub.s32 %s15, 2
        // Predicated region
        $region53: #{tpu_custom_call.1} parent=51 // pred_check
          %p1536 = pneg %p105
        $region54: #{tpu_custom_call.1} parent=51 // pred_check_branch
          %1538 = sbr.rel (%p1536) target = $region56
        $region55: #{tpu_custom_call.1} parent=51 // pred_region
          %s1539 = sand.u32 %s90, 1
          %s1540 = scalar_lea.sflag [#allocation7], %s1539
          %s1541 = sand.u32 %s90, 1
          %s1542 = smul.addr %s1541, 16
          %s1543 = scalar_lea.vmem [#allocation10], %s1542
          %1544 = dma.done %s1540, 256
        $region56: #{tpu_custom_call.1} parent=51 // pred_fallthru
          _
      $region52: #{tpu_custom_call.1} parent=5 // pred_fallthru
        _
    $region6: #{tpu_custom_call.1} parent=1 // loop_footer
      %s19 = sadd.s32 1, %s15
    $region7: #{tpu_custom_call.1} parent=1 // loop_footer_branch
      %14 = sbr.rel target = $region3
    $region8: #{tpu_custom_call.1} parent=1 // loop_exit
      _
    %1545 = vsyncpa [#allocation6], 1
    %s1546 = scalar_lea.sflag [#allocation6], 1
    %1547 = vsyncpa %s1546, 1
    %1548 = vsyncpa [#allocation9], 1
    %1549 = vsyncpa [#allocation7], 1
    %s1550 = scalar_lea.sflag [#allocation7], 1
    %1551 = vsyncpa %s1550, 1

</llo_original>
